<compile_context>
chip_gen: v6e
topology: v6e:2x2x1
jax: 0.10.0
libtpu: 0.0.40
codegen_flags: <defaults>
</compile_context>

<pallas_src>
import functools

import numpy as np
import jax
import jax.numpy as jnp
from jax.experimental import pallas as pl
from jax.experimental.pallas import tpu as pltpu

SELU_ALPHA = 1.6732632423543772
SELU_SCALE = 1.0507009873554805
_LANE = 128
_SUBLANE = 16  # bf16 sublane packing


def _round_up(n, m):
    return ((n + m - 1) // m) * m


def _device_kind():
    try:
        return jax.devices()[0].device_kind.lower()
    except Exception:
        return ""


def _default_compute_dtype():
    kind = _device_kind()
    # v5e and older have no bf16 VPU/EUP -> keep the elementwise epilogue in f32 there.
    if any(t in kind for t in ("v2", "v3", "v4", "v5")):
        return "float32"
    return "bfloat16"  # v6e / v7x: bf16-native VPU/EUP


def _vmem_cap_bytes():
    kind = _device_kind()
    if "v7" in kind or "tpu7" in kind:
        return 48 * 1024 * 1024   # 64 MiB physical per TC; leave headroom
    if any(t in kind for t in ("v2", "v3")):
        return 12 * 1024 * 1024
    return 96 * 1024 * 1024       # v4/v5e/v6e: 128 MiB physical


# --------------------------------------------------------------------------------------
# Kernel
# --------------------------------------------------------------------------------------
def _autoppi_kernel(x_ref,
                    w1_ref, b1_ref, w2_ref, b2_ref, w3_ref, b3_ref,
                    w4_ref, b4_ref, w5_ref, b5_ref, w6_ref, b6_ref,
                    o_ref, *, compute_dtype):
    """Fused 6-layer MLP.  SELU's output scale is pre-folded into W2..W6."""

    def hidden(h, w_ref, b_ref):
        # bf16 x bf16 -> f32 accumulation on the MXU.
        y = jnp.dot(h, w_ref[...], preferred_element_type=jnp.float32)
        # Epilogue (bias + SELU w/o output scale) in compute_dtype (bf16 on v6e/v7x).
        y = y.astype(compute_dtype) + b_ref[...]
        y = jnp.maximum(y, 0.0) + SELU_ALPHA * (jnp.exp(jnp.minimum(y, 0.0)) - 1.0)
        return y.astype(jnp.bfloat16)   # no-op when compute_dtype == bf16

    h = x_ref[...]                      # already bf16
    h = hidden(h, w1_ref, b1_ref)
    h = hidden(h, w2_ref, b2_ref)
    h = hidden(h, w3_ref, b3_ref)
    h = hidden(h, w4_ref, b4_ref)
    h = hidden(h, w5_ref, b5_ref)
    # Final decoder layer: NO activation; bias add in f32.
    y = jnp.dot(h, w6_ref[...], preferred_element_type=jnp.float32) + b6_ref[...]
    o_ref[...] = y.astype(o_ref.dtype)


# --------------------------------------------------------------------------------------
# Parameter preparation (done ONCE, outside the jitted forward)
# --------------------------------------------------------------------------------------
def init_params(feature_size, reg_size, min_size, key):
    """nn.Linear-like init (uniform +-1/sqrt(fan_in)).  Weights are pre-transposed to
    [in_features, out_features] so the kernel computes y = x @ W + b."""
    dims = [
        (feature_size * 2, reg_size),   # EncL1
        (reg_size, reg_size),           # EncL2
        (reg_size, min_size),           # EncL3
        (min_size, reg_size),           # DecL1
        (reg_size, reg_size),           # DecL2
        (reg_size, feature_size * 2),   # DecL3
    ]
    params = []
    for (fan_in, fan_out) in dims:
        key, kw, kb = jax.random.split(key, 3)
        bound = 1.0 / (fan_in ** 0.5)
        w = jax.random.uniform(kw, (fan_in, fan_out), jnp.float32, -bound, bound)
        b = jax.random.uniform(kb, (fan_out,), jnp.float32, -bound, bound)
        params.append((w, b))
    return params


def prepare_params(params, compute_dtype):
    """Pad to lane multiples, fold SELU_SCALE into W2..W6, cast weights to bf16.
    Biases of hidden layers are stored in compute_dtype; the last bias stays f32."""
    n = len(params)
    flat, widths_p = [], []
    for i, (w, b) in enumerate(params):
        w = jnp.asarray(w, jnp.float32)
        b = jnp.asarray(b, jnp.float32).reshape(1, -1)
        if i > 0:
            w = w * SELU_SCALE          # exact fold of previous layer's SELU scale
        fi, fo = w.shape
        fi_p, fo_p = _round_up(fi, _LANE), _round_up(fo, _LANE)
        w_p = jnp.zeros((fi_p, fo_p), jnp.bfloat16).at[:fi, :fo].set(
            w.astype(jnp.bfloat16))
        b_dt = "float32" if i == n - 1 else compute_dtype
        b_p = jnp.zeros((1, fo_p), b_dt).at[:, :fo].set(b.astype(b_dt))
        flat.extend([w_p, b_p])
        widths_p.append(fo_p)

    in_dim = params[0][0].shape[0]
    out_dim = params[-1][0].shape[1]
    in_p = _round_up(in_dim, _LANE)
    weight_bytes = sum(int(a.size) * a.dtype.itemsize for a in flat)
    return dict(flat=tuple(flat), in_dim=int(in_dim), out_dim=int(out_dim),
                in_p=int(in_p), out_p=int(widths_p[-1]),
                widths_p=tuple([int(in_p)] + [int(w) for w in widths_p]),
                weight_bytes=int(weight_bytes), compute_dtype=compute_dtype)


# --------------------------------------------------------------------------------------
# Forward
# --------------------------------------------------------------------------------------
def _choose_block_batch(B, in_p, out_p, max_w_p, weight_bytes, weight_factor, vmem_cap):
    B16 = _round_up(max(B, 1), _SUBLANE)
    if B16 <= 128:
        return B16                      # tiny batch: one grid step, whole batch resident
    # Per-row VMEM: double-buffered bf16 input + f32 output tiles + ~3 live f32 tiles.
    per_row = 2 * 2 * in_p + 2 * 4 * out_p + 3 * 4 * max_w_p
    budget = int(vmem_cap * 0.75) - weight_factor * weight_bytes
    rows_fit = (budget // per_row) if budget > 0 else 0
    rows_fit = max(_SUBLANE, (rows_fit // _SUBLANE) * _SUBLANE)
    # At least 2 batch tiles so the "parallel" axis shards across v7x's 2 TensorCores.
    half = _round_up((B16 + 1) // 2, _SUBLANE)
    return int(max(_SUBLANE, min(512, rows_fit, half)))


@functools.partial(jax.jit, static_argnames=(
    "block_batch", "compute_dtype", "out_dtype", "single_buffer_consts",
    "vmem_limit_bytes"))
def _forward_padded(x_p, flat, *, block_batch, compute_dtype, out_dtype,
                    single_buffer_consts, vmem_limit_bytes):
    B_pad, in_p = x_p.shape
    out_p = flat[-2].shape[1]
    grid = (B_pad // block_batch,)

    def const_spec(shape):
        imap = lambda i: (0,) * len(shape)
        if single_buffer_consts:
            # Grid-invariant block: no re-DMA, and single-buffered to halve its VMEM.
            return pl.BlockSpec(shape, imap, pipeline_mode=pl.Buffered(1))
        return pl.BlockSpec(shape, imap)

    in_specs = [pl.BlockSpec((block_batch, in_p), lambda i: (i, 0))]
    for arr in flat:
        in_specs.append(const_spec(arr.shape))
    out_specs = pl.BlockSpec((block_batch, out_p), lambda i: (i, 0))

    weights = flat[0::2]
    flops = 2 * B_pad * sum(int(w.shape[0]) * int(w.shape[1]) for w in weights)
    transcendentals = B_pad * sum(int(w.shape[1]) for w in weights[:-1])
    bytes_accessed = (int(x_p.size) * x_p.dtype.itemsize
                      + int(B_pad) * int(out_p) * np.dtype(out_dtype).itemsize
                      + sum(int(a.size) * a.dtype.itemsize for a in flat))

    kernel = functools.partial(_autoppi_kernel, compute_dtype=compute_dtype)

    return pl.pallas_call(
        kernel,
        out_shape=jax.ShapeDtypeStruct((B_pad, out_p), np.dtype(out_dtype)),
        grid_spec=pltpu.PrefetchScalarGridSpec(
            num_scalar_prefetch=0,
            grid=grid,
            in_specs=in_specs,
            out_specs=out_specs,
        ),
        compiler_params=pltpu.CompilerParams(
            dimension_semantics=("parallel",),
            vmem_limit_bytes=vmem_limit_bytes,
        ),
        cost_estimate=pl.CostEstimate(
            flops=flops, transcendentals=transcendentals,
            bytes_accessed=bytes_accessed),
    )(x_p, *flat)


def autoppi_forward(x, prep, *, out_dtype="float32", block_batch=None,
                    single_buffer_consts=True):
    B, in_dim = x.shape
    assert in_dim == prep["in_dim"]
    vmem_cap = _vmem_cap_bytes()
    weight_factor = 1 if single_buffer_consts else 2
    if block_batch is None:
        block_batch = _choose_block_batch(
            B, prep["in_p"], prep["out_p"], max(prep["widths_p"]),
            prep["weight_bytes"], weight_factor, vmem_cap)
    B_pad = _round_up(_round_up(B, _SUBLANE), block_batch)

    if B_pad == B and prep["in_p"] == in_dim:
        x_p = x.astype(jnp.bfloat16)
    else:
        x_p = jnp.zeros((B_pad, prep["in_p"]), jnp.bfloat16).at[:B, :in_dim].set(
            x.astype(jnp.bfloat16))

    est = (weight_factor * prep["weight_bytes"]
           + 2 * block_batch * prep["in_p"] * 2
           + 2 * block_batch * prep["out_p"] * np.dtype(out_dtype).itemsize
           + 3 * block_batch * max(prep["widths_p"]) * 4)
    vmem_limit = int(min(vmem_cap, max(32 * 1024 * 1024, int(est * 1.5))))

    out = _forward_padded(x_p, prep["flat"],
                          block_batch=int(block_batch),
                          compute_dtype=prep["compute_dtype"],
                          out_dtype=out_dtype,
                          single_buffer_consts=bool(single_buffer_consts),
                          vmem_limit_bytes=vmem_limit)
    return out[:B, :prep["out_dim"]]


def reference_forward(x, prep, out_dtype="float32"):
    """Pure-JAX reference with numerics identical to the kernel path."""
    B, in_dim = x.shape
    cdt = prep["compute_dtype"]
    x_p = jnp.zeros((B, prep["in_p"]), jnp.bfloat16).at[:, :in_dim].set(
        x.astype(jnp.bfloat16))
    flat = prep["flat"]
    n = len(flat) // 2
    h = x_p
    for i in range(n):
        w, b = flat[2 * i], flat[2 * i + 1]
        y = jnp.dot(h, w, preferred_element_type=jnp.float32)
        if i < n - 1:
            y = y.astype(cdt) + b
            y = jnp.maximum(y, 0.0) + SELU_ALPHA * (jnp.exp(jnp.minimum(y, 0.0)) - 1.0)
            h = y.astype(jnp.bfloat16)
        else:
            y = y + b
    return y[:, :prep["out_dim"]].astype(np.dtype(out_dtype))


# --------------------------------------------------------------------------------------
if __name__ == "__main__":
    # Small shapes consistent with the module (featureSize/regSize/minSize are ctor args).
    FEATURE_SIZE = 64     # -> input dim = 2 * 64 = 128
    REG_SIZE = 96
    MIN_SIZE = 32
    BATCH = 16

    key = jax.random.PRNGKey(0)
    kx, kp = jax.random.split(key)
    x = jax.random.normal(kx, (BATCH, FEATURE_SIZE * 2), dtype=jnp.float32)
    params = init_params(FEATURE_SIZE, REG_SIZE, MIN_SIZE, kp)

    def run(conservative):
        cdt = "float32" if conservative else _default_compute_dtype()
        prep = prepare_params(params, cdt)
        out = autoppi_forward(x, prep, out_dtype="float32",
                              single_buffer_consts=not conservative)
        out = jax.block_until_ready(out)
        ref = reference_forward(x, prep, out_dtype="float32")
        return out, ref

    try:
        out, ref = run(conservative=False)
    except Exception:
        # Fallback: f32 epilogue + default (double) buffering — the previously
        # validated configuration — in case Buffered(1)/bf16 epilogue is rejected.
        out, ref = run(conservative=True)

    assert out.shape == (BATCH, FEATURE_SIZE * 2), out.shape
    max_err = float(jnp.max(jnp.abs(out - ref)))
    assert jnp.allclose(out, ref, atol=5e-2, rtol=5e-2), f"mismatch (max err {max_err})"
    print("KERNEL_OK")
</pallas_src>

<mosaic_0001>
module attributes {stable_mosaic.version = 11 : i64} {
  func.func @_autoppi_kernel(%arg0: i32, %arg1: memref<16x128xbf16, #tpu.memory_space<vmem>>, %arg2: memref<128x128xbf16, #tpu.memory_space<vmem>>, %arg3: memref<1x128xbf16, #tpu.memory_space<vmem>>, %arg4: memref<128x128xbf16, #tpu.memory_space<vmem>>, %arg5: memref<1x128xbf16, #tpu.memory_space<vmem>>, %arg6: memref<128x128xbf16, #tpu.memory_space<vmem>>, %arg7: memref<1x128xbf16, #tpu.memory_space<vmem>>, %arg8: memref<128x128xbf16, #tpu.memory_space<vmem>>, %arg9: memref<1x128xbf16, #tpu.memory_space<vmem>>, %arg10: memref<128x128xbf16, #tpu.memory_space<vmem>>, %arg11: memref<1x128xbf16, #tpu.memory_space<vmem>>, %arg12: memref<128x128xbf16, #tpu.memory_space<vmem>>, %arg13: memref<1x128xf32, #tpu.memory_space<vmem>>, %arg14: memref<16x128xf32, #tpu.memory_space<vmem>>) attributes {dimension_semantics = [#tpu.dimension_semantics<parallel>], iteration_bounds = array<i64: 1>, scalar_prefetch = 0 : i64, scratch_operands = 0 : i64, tpu.core_type = #tpu.core_type<tc>, window_params = [{transform_indices = @transform_0, window_bounds = array<i64: 16, 128>}, {pipeline_mode = #tpu.pipeline_mode<synchronous>, transform_indices = @transform_1, window_bounds = array<i64: 128, 128>}, {pipeline_mode = #tpu.pipeline_mode<synchronous>, transform_indices = @transform_2, window_bounds = array<i64: 1, 128>}, {pipeline_mode = #tpu.pipeline_mode<synchronous>, transform_indices = @transform_3, window_bounds = array<i64: 128, 128>}, {pipeline_mode = #tpu.pipeline_mode<synchronous>, transform_indices = @transform_4, window_bounds = array<i64: 1, 128>}, {pipeline_mode = #tpu.pipeline_mode<synchronous>, transform_indices = @transform_5, window_bounds = array<i64: 128, 128>}, {pipeline_mode = #tpu.pipeline_mode<synchronous>, transform_indices = @transform_6, window_bounds = array<i64: 1, 128>}, {pipeline_mode = #tpu.pipeline_mode<synchronous>, transform_indices = @transform_7, window_bounds = array<i64: 128, 128>}, {pipeline_mode = #tpu.pipeline_mode<synchronous>, transform_indices = @transform_8, window_bounds = array<i64: 1, 128>}, {pipeline_mode = #tpu.pipeline_mode<synchronous>, transform_indices = @transform_9, window_bounds = array<i64: 128, 128>}, {pipeline_mode = #tpu.pipeline_mode<synchronous>, transform_indices = @transform_10, window_bounds = array<i64: 1, 128>}, {pipeline_mode = #tpu.pipeline_mode<synchronous>, transform_indices = @transform_11, window_bounds = array<i64: 128, 128>}, {pipeline_mode = #tpu.pipeline_mode<synchronous>, transform_indices = @transform_12, window_bounds = array<i64: 1, 128>}, {transform_indices = @transform_13, window_bounds = array<i64: 16, 128>}]} {
    %c0 = arith.constant 0 : index
    %c0_0 = arith.constant 0 : index
    %0 = vector.load %arg1[%c0, %c0_0] : memref<16x128xbf16, #tpu.memory_space<vmem>>, vector<16x128xbf16>
    %c0_1 = arith.constant 0 : index
    %c0_2 = arith.constant 0 : index
    %1 = vector.load %arg2[%c0_1, %c0_2] : memref<128x128xbf16, #tpu.memory_space<vmem>>, vector<128x128xbf16>
    %cst = arith.constant dense<0.000000e+00> : vector<16x128xf32>
    %2 = tpu.matmul %0, %1, %cst {dimension_numbers = #tpu.dot_dimension_numbers<[1], [0], [0], [1], [0, 0, 1, 1], [], []>} : vector<16x128xbf16>, vector<128x128xbf16>, vector<16x128xf32> -> vector<16x128xf32>
    %3 = arith.truncf %2 : vector<16x128xf32> to vector<16x128xbf16>
    %c0_3 = arith.constant 0 : index
    %c0_4 = arith.constant 0 : index
    %4 = vector.load %arg3[%c0_3, %c0_4] : memref<1x128xbf16, #tpu.memory_space<vmem>>, vector<1x128xbf16>
    %5 = vector.broadcast %4 : vector<1x128xbf16> to vector<16x128xbf16>
    %6 = arith.addf %3, %5 : vector<16x128xbf16>
    %cst_5 = arith.constant 0.000000e+00 : bf16
    %7 = vector.broadcast %cst_5 : bf16 to vector<16x128xbf16>
    %8 = arith.maximumf %6, %7 : vector<16x128xbf16>
    %cst_6 = arith.constant 0.000000e+00 : bf16
    %9 = vector.broadcast %cst_6 : bf16 to vector<16x128xbf16>
    %10 = arith.minimumf %6, %9 : vector<16x128xbf16>
    %11 = math.exp %10 : vector<16x128xbf16>
    %cst_7 = arith.constant 1.000000e+00 : bf16
    %12 = vector.broadcast %cst_7 : bf16 to vector<16x128xbf16>
    %13 = arith.subf %11, %12 : vector<16x128xbf16>
    %cst_8 = arith.constant 1.671880e+00 : bf16
    %14 = vector.broadcast %cst_8 : bf16 to vector<16x128xbf16>
    %15 = arith.mulf %14, %13 : vector<16x128xbf16>
    %16 = arith.addf %8, %15 : vector<16x128xbf16>
    %c0_9 = arith.constant 0 : index
    %c0_10 = arith.constant 0 : index
    %17 = vector.load %arg4[%c0_9, %c0_10] : memref<128x128xbf16, #tpu.memory_space<vmem>>, vector<128x128xbf16>
    %cst_11 = arith.constant dense<0.000000e+00> : vector<16x128xf32>
    %18 = tpu.matmul %16, %17, %cst_11 {dimension_numbers = #tpu.dot_dimension_numbers<[1], [0], [0], [1], [0, 0, 1, 1], [], []>} : vector<16x128xbf16>, vector<128x128xbf16>, vector<16x128xf32> -> vector<16x128xf32>
    %19 = arith.truncf %18 : vector<16x128xf32> to vector<16x128xbf16>
    %c0_12 = arith.constant 0 : index
    %c0_13 = arith.constant 0 : index
    %20 = vector.load %arg5[%c0_12, %c0_13] : memref<1x128xbf16, #tpu.memory_space<vmem>>, vector<1x128xbf16>
    %21 = vector.broadcast %20 : vector<1x128xbf16> to vector<16x128xbf16>
    %22 = arith.addf %19, %21 : vector<16x128xbf16>
    %cst_14 = arith.constant 0.000000e+00 : bf16
    %23 = vector.broadcast %cst_14 : bf16 to vector<16x128xbf16>
    %24 = arith.maximumf %22, %23 : vector<16x128xbf16>
    %cst_15 = arith.constant 0.000000e+00 : bf16
    %25 = vector.broadcast %cst_15 : bf16 to vector<16x128xbf16>
    %26 = arith.minimumf %22, %25 : vector<16x128xbf16>
    %27 = math.exp %26 : vector<16x128xbf16>
    %cst_16 = arith.constant 1.000000e+00 : bf16
    %28 = vector.broadcast %cst_16 : bf16 to vector<16x128xbf16>
    %29 = arith.subf %27, %28 : vector<16x128xbf16>
    %cst_17 = arith.constant 1.671880e+00 : bf16
    %30 = vector.broadcast %cst_17 : bf16 to vector<16x128xbf16>
    %31 = arith.mulf %30, %29 : vector<16x128xbf16>
    %32 = arith.addf %24, %31 : vector<16x128xbf16>
    %c0_18 = arith.constant 0 : index
    %c0_19 = arith.constant 0 : index
    %33 = vector.load %arg6[%c0_18, %c0_19] : memref<128x128xbf16, #tpu.memory_space<vmem>>, vector<128x128xbf16>
    %cst_20 = arith.constant dense<0.000000e+00> : vector<16x128xf32>
    %34 = tpu.matmul %32, %33, %cst_20 {dimension_numbers = #tpu.dot_dimension_numbers<[1], [0], [0], [1], [0, 0, 1, 1], [], []>} : vector<16x128xbf16>, vector<128x128xbf16>, vector<16x128xf32> -> vector<16x128xf32>
    %35 = arith.truncf %34 : vector<16x128xf32> to vector<16x128xbf16>
    %c0_21 = arith.constant 0 : index
    %c0_22 = arith.constant 0 : index
    %36 = vector.load %arg7[%c0_21, %c0_22] : memref<1x128xbf16, #tpu.memory_space<vmem>>, vector<1x128xbf16>
    %37 = vector.broadcast %36 : vector<1x128xbf16> to vector<16x128xbf16>
    %38 = arith.addf %35, %37 : vector<16x128xbf16>
    %cst_23 = arith.constant 0.000000e+00 : bf16
    %39 = vector.broadcast %cst_23 : bf16 to vector<16x128xbf16>
    %40 = arith.maximumf %38, %39 : vector<16x128xbf16>
    %cst_24 = arith.constant 0.000000e+00 : bf16
    %41 = vector.broadcast %cst_24 : bf16 to vector<16x128xbf16>
    %42 = arith.minimumf %38, %41 : vector<16x128xbf16>
    %43 = math.exp %42 : vector<16x128xbf16>
    %cst_25 = arith.constant 1.000000e+00 : bf16
    %44 = vector.broadcast %cst_25 : bf16 to vector<16x128xbf16>
    %45 = arith.subf %43, %44 : vector<16x128xbf16>
    %cst_26 = arith.constant 1.671880e+00 : bf16
    %46 = vector.broadcast %cst_26 : bf16 to vector<16x128xbf16>
    %47 = arith.mulf %46, %45 : vector<16x128xbf16>
    %48 = arith.addf %40, %47 : vector<16x128xbf16>
    %c0_27 = arith.constant 0 : index
    %c0_28 = arith.constant 0 : index
    %49 = vector.load %arg8[%c0_27, %c0_28] : memref<128x128xbf16, #tpu.memory_space<vmem>>, vector<128x128xbf16>
    %cst_29 = arith.constant dense<0.000000e+00> : vector<16x128xf32>
    %50 = tpu.matmul %48, %49, %cst_29 {dimension_numbers = #tpu.dot_dimension_numbers<[1], [0], [0], [1], [0, 0, 1, 1], [], []>} : vector<16x128xbf16>, vector<128x128xbf16>, vector<16x128xf32> -> vector<16x128xf32>
    %51 = arith.truncf %50 : vector<16x128xf32> to vector<16x128xbf16>
    %c0_30 = arith.constant 0 : index
    %c0_31 = arith.constant 0 : index
    %52 = vector.load %arg9[%c0_30, %c0_31] : memref<1x128xbf16, #tpu.memory_space<vmem>>, vector<1x128xbf16>
    %53 = vector.broadcast %52 : vector<1x128xbf16> to vector<16x128xbf16>
    %54 = arith.addf %51, %53 : vector<16x128xbf16>
    %cst_32 = arith.constant 0.000000e+00 : bf16
    %55 = vector.broadcast %cst_32 : bf16 to vector<16x128xbf16>
    %56 = arith.maximumf %54, %55 : vector<16x128xbf16>
    %cst_33 = arith.constant 0.000000e+00 : bf16
    %57 = vector.broadcast %cst_33 : bf16 to vector<16x128xbf16>
    %58 = arith.minimumf %54, %57 : vector<16x128xbf16>
    %59 = math.exp %58 : vector<16x128xbf16>
    %cst_34 = arith.constant 1.000000e+00 : bf16
    %60 = vector.broadcast %cst_34 : bf16 to vector<16x128xbf16>
    %61 = arith.subf %59, %60 : vector<16x128xbf16>
    %cst_35 = arith.constant 1.671880e+00 : bf16
    %62 = vector.broadcast %cst_35 : bf16 to vector<16x128xbf16>
    %63 = arith.mulf %62, %61 : vector<16x128xbf16>
    %64 = arith.addf %56, %63 : vector<16x128xbf16>
    %c0_36 = arith.constant 0 : index
    %c0_37 = arith.constant 0 : index
    %65 = vector.load %arg10[%c0_36, %c0_37] : memref<128x128xbf16, #tpu.memory_space<vmem>>, vector<128x128xbf16>
    %cst_38 = arith.constant dense<0.000000e+00> : vector<16x128xf32>
    %66 = tpu.matmul %64, %65, %cst_38 {dimension_numbers = #tpu.dot_dimension_numbers<[1], [0], [0], [1], [0, 0, 1, 1], [], []>} : vector<16x128xbf16>, vector<128x128xbf16>, vector<16x128xf32> -> vector<16x128xf32>
    %67 = arith.truncf %66 : vector<16x128xf32> to vector<16x128xbf16>
    %c0_39 = arith.constant 0 : index
    %c0_40 = arith.constant 0 : index
    %68 = vector.load %arg11[%c0_39, %c0_40] : memref<1x128xbf16, #tpu.memory_space<vmem>>, vector<1x128xbf16>
    %69 = vector.broadcast %68 : vector<1x128xbf16> to vector<16x128xbf16>
    %70 = arith.addf %67, %69 : vector<16x128xbf16>
    %cst_41 = arith.constant 0.000000e+00 : bf16
    %71 = vector.broadcast %cst_41 : bf16 to vector<16x128xbf16>
    %72 = arith.maximumf %70, %71 : vector<16x128xbf16>
    %cst_42 = arith.constant 0.000000e+00 : bf16
    %73 = vector.broadcast %cst_42 : bf16 to vector<16x128xbf16>
    %74 = arith.minimumf %70, %73 : vector<16x128xbf16>
    %75 = math.exp %74 : vector<16x128xbf16>
    %cst_43 = arith.constant 1.000000e+00 : bf16
    %76 = vector.broadcast %cst_43 : bf16 to vector<16x128xbf16>
    %77 = arith.subf %75, %76 : vector<16x128xbf16>
    %cst_44 = arith.constant 1.671880e+00 : bf16
    %78 = vector.broadcast %cst_44 : bf16 to vector<16x128xbf16>
    %79 = arith.mulf %78, %77 : vector<16x128xbf16>
    %80 = arith.addf %72, %79 : vector<16x128xbf16>
    %c0_45 = arith.constant 0 : index
    %c0_46 = arith.constant 0 : index
    %81 = vector.load %arg12[%c0_45, %c0_46] : memref<128x128xbf16, #tpu.memory_space<vmem>>, vector<128x128xbf16>
    %cst_47 = arith.constant dense<0.000000e+00> : vector<16x128xf32>
    %82 = tpu.matmul %80, %81, %cst_47 {dimension_numbers = #tpu.dot_dimension_numbers<[1], [0], [0], [1], [0, 0, 1, 1], [], []>} : vector<16x128xbf16>, vector<128x128xbf16>, vector<16x128xf32> -> vector<16x128xf32>
    %c0_48 = arith.constant 0 : index
    %c0_49 = arith.constant 0 : index
    %83 = vector.load %arg13[%c0_48, %c0_49] : memref<1x128xf32, #tpu.memory_space<vmem>>, vector<1x128xf32>
    %84 = vector.broadcast %83 : vector<1x128xf32> to vector<16x128xf32>
    %85 = arith.addf %82, %84 : vector<16x128xf32>
    %c0_50 = arith.constant 0 : index
    %c0_51 = arith.constant 0 : index
    %86 = vector.load %arg14[%c0_50, %c0_51] : memref<16x128xf32, #tpu.memory_space<vmem>>, vector<16x128xf32>
    tpu.vector_store %arg14[%c0_50, %c0_51], %85 {strides = array<i32>} : memref<16x128xf32, #tpu.memory_space<vmem>>, vector<16x128xf32>,
    return
  }
  func.func @transform_0(%arg0: i32) -> (i32, i32) {
    %c0_i32 = arith.constant 0 : i32
    %c0_i32_0 = arith.constant 0 : i32
    return %arg0, %c0_i32 : i32, i32
  }
  func.func @transform_1(%arg0: i32) -> (i32, i32) {
    %c0_i32 = arith.constant 0 : i32
    %c0_i32_0 = arith.constant 0 : i32
    %c0_i32_1 = arith.constant 0 : i32
    return %c0_i32, %c0_i32_0 : i32, i32
  }
  func.func @transform_2(%arg0: i32) -> (i32, i32) {
    %c0_i32 = arith.constant 0 : i32
    %c0_i32_0 = arith.constant 0 : i32
    %c0_i32_1 = arith.constant 0 : i32
    return %c0_i32, %c0_i32_0 : i32, i32
  }
  func.func @transform_3(%arg0: i32) -> (i32, i32) {
    %c0_i32 = arith.constant 0 : i32
    %c0_i32_0 = arith.constant 0 : i32
    %c0_i32_1 = arith.constant 0 : i32
    return %c0_i32, %c0_i32_0 : i32, i32
  }
  func.func @transform_4(%arg0: i32) -> (i32, i32) {
    %c0_i32 = arith.constant 0 : i32
    %c0_i32_0 = arith.constant 0 : i32
    %c0_i32_1 = arith.constant 0 : i32
    return %c0_i32, %c0_i32_0 : i32, i32
  }
  func.func @transform_5(%arg0: i32) -> (i32, i32) {
    %c0_i32 = arith.constant 0 : i32
    %c0_i32_0 = arith.constant 0 : i32
    %c0_i32_1 = arith.constant 0 : i32
    return %c0_i32, %c0_i32_0 : i32, i32
  }
  func.func @transform_6(%arg0: i32) -> (i32, i32) {
    %c0_i32 = arith.constant 0 : i32
    %c0_i32_0 = arith.constant 0 : i32
    %c0_i32_1 = arith.constant 0 : i32
    return %c0_i32, %c0_i32_0 : i32, i32
  }
  func.func @transform_7(%arg0: i32) -> (i32, i32) {
    %c0_i32 = arith.constant 0 : i32
    %c0_i32_0 = arith.constant 0 : i32
    %c0_i32_1 = arith.constant 0 : i32
    return %c0_i32, %c0_i32_0 : i32, i32
  }
  func.func @transform_8(%arg0: i32) -> (i32, i32) {
    %c0_i32 = arith.constant 0 : i32
    %c0_i32_0 = arith.constant 0 : i32
    %c0_i32_1 = arith.constant 0 : i32
    return %c0_i32, %c0_i32_0 : i32, i32
  }
  func.func @transform_9(%arg0: i32) -> (i32, i32) {
    %c0_i32 = arith.constant 0 : i32
    %c0_i32_0 = arith.constant 0 : i32
    %c0_i32_1 = arith.constant 0 : i32
    return %c0_i32, %c0_i32_0 : i32, i32
  }
  func.func @transform_10(%arg0: i32) -> (i32, i32) {
    %c0_i32 = arith.constant 0 : i32
    %c0_i32_0 = arith.constant 0 : i32
    %c0_i32_1 = arith.constant 0 : i32
    return %c0_i32, %c0_i32_0 : i32, i32
  }
  func.func @transform_11(%arg0: i32) -> (i32, i32) {
    %c0_i32 = arith.constant 0 : i32
    %c0_i32_0 = arith.constant 0 : i32
    %c0_i32_1 = arith.constant 0 : i32
    return %c0_i32, %c0_i32_0 : i32, i32
  }
  func.func @transform_12(%arg0: i32) -> (i32, i32) {
    %c0_i32 = arith.constant 0 : i32
    %c0_i32_0 = arith.constant 0 : i32
    %c0_i32_1 = arith.constant 0 : i32
    return %c0_i32, %c0_i32_0 : i32, i32
  }
  func.func @transform_13(%arg0: i32) -> (i32, i32) {
    %c0_i32 = arith.constant 0 : i32
    %c0_i32_0 = arith.constant 0 : i32
    return %arg0, %c0_i32 : i32, i32
  }
}

module attributes {stable_mosaic.version = 11 : i64} {
  func.func @_autoppi_kernel(%arg0: i32, %arg1: memref<16x128xbf16, #tpu.memory_space<vmem>>, %arg2: memref<128x128xbf16, #tpu.memory_space<vmem>>, %arg3: memref<1x128xf32, #tpu.memory_space<vmem>>, %arg4: memref<128x128xbf16, #tpu.memory_space<vmem>>, %arg5: memref<1x128xf32, #tpu.memory_space<vmem>>, %arg6: memref<128x128xbf16, #tpu.memory_space<vmem>>, %arg7: memref<1x128xf32, #tpu.memory_space<vmem>>, %arg8: memref<128x128xbf16, #tpu.memory_space<vmem>>, %arg9: memref<1x128xf32, #tpu.memory_space<vmem>>, %arg10: memref<128x128xbf16, #tpu.memory_space<vmem>>, %arg11: memref<1x128xf32, #tpu.memory_space<vmem>>, %arg12: memref<128x128xbf16, #tpu.memory_space<vmem>>, %arg13: memref<1x128xf32, #tpu.memory_space<vmem>>, %arg14: memref<16x128xf32, #tpu.memory_space<vmem>>) attributes {dimension_semantics = [#tpu.dimension_semantics<parallel>], iteration_bounds = array<i64: 1>, scalar_prefetch = 0 : i64, scratch_operands = 0 : i64, tpu.core_type = #tpu.core_type<tc>, window_params = [{transform_indices = @transform_0, window_bounds = array<i64: 16, 128>}, {pipeline_mode = #tpu.pipeline_mode<synchronous>, transform_indices = @transform_1, window_bounds = array<i64: 128, 128>}, {pipeline_mode = #tpu.pipeline_mode<synchronous>, transform_indices = @transform_2, window_bounds = array<i64: 1, 128>}, {pipeline_mode = #tpu.pipeline_mode<synchronous>, transform_indices = @transform_3, window_bounds = array<i64: 128, 128>}, {pipeline_mode = #tpu.pipeline_mode<synchronous>, transform_indices = @transform_4, window_bounds = array<i64: 1, 128>}, {pipeline_mode = #tpu.pipeline_mode<synchronous>, transform_indices = @transform_5, window_bounds = array<i64: 128, 128>}, {pipeline_mode = #tpu.pipeline_mode<synchronous>, transform_indices = @transform_6, window_bounds = array<i64: 1, 128>}, {pipeline_mode = #tpu.pipeline_mode<synchronous>, transform_indices = @transform_7, window_bounds = array<i64: 128, 128>}, {pipeline_mode = #tpu.pipeline_mode<synchronous>, transform_indices = @transform_8, window_bounds = array<i64: 1, 128>}, {pipeline_mode = #tpu.pipeline_mode<synchronous>, transform_indices = @transform_9, window_bounds = array<i64: 128, 128>}, {pipeline_mode = #tpu.pipeline_mode<synchronous>, transform_indices = @transform_10, window_bounds = array<i64: 1, 128>}, {pipeline_mode = #tpu.pipeline_mode<synchronous>, transform_indices = @transform_11, window_bounds = array<i64: 128, 128>}, {pipeline_mode = #tpu.pipeline_mode<synchronous>, transform_indices = @transform_12, window_bounds = array<i64: 1, 128>}, {transform_indices = @transform_13, window_bounds = array<i64: 16, 128>}]} {
    %c0 = arith.constant 0 : index
    %c0_0 = arith.constant 0 : index
    %0 = vector.load %arg1[%c0, %c0_0] : memref<16x128xbf16, #tpu.memory_space<vmem>>, vector<16x128xbf16>
    %c0_1 = arith.constant 0 : index
    %c0_2 = arith.constant 0 : index
    %1 = vector.load %arg2[%c0_1, %c0_2] : memref<128x128xbf16, #tpu.memory_space<vmem>>, vector<128x128xbf16>
    %cst = arith.constant dense<0.000000e+00> : vector<16x128xf32>
    %2 = tpu.matmul %0, %1, %cst {dimension_numbers = #tpu.dot_dimension_numbers<[1], [0], [0], [1], [0, 0, 1, 1], [], []>} : vector<16x128xbf16>, vector<128x128xbf16>, vector<16x128xf32> -> vector<16x128xf32>
    %c0_3 = arith.constant 0 : index
    %c0_4 = arith.constant 0 : index
    %3 = vector.load %arg3[%c0_3, %c0_4] : memref<1x128xf32, #tpu.memory_space<vmem>>, vector<1x128xf32>
    %4 = vector.broadcast %3 : vector<1x128xf32> to vector<16x128xf32>
    %5 = arith.addf %2, %4 : vector<16x128xf32>
    %cst_5 = arith.constant 0.000000e+00 : f32
    %6 = vector.broadcast %cst_5 : f32 to vector<16x128xf32>
    %7 = arith.maximumf %5, %6 : vector<16x128xf32>
    %cst_6 = arith.constant 0.000000e+00 : f32
    %8 = vector.broadcast %cst_6 : f32 to vector<16x128xf32>
    %9 = arith.minimumf %5, %8 : vector<16x128xf32>
    %10 = math.exp %9 : vector<16x128xf32>
    %cst_7 = arith.constant 1.000000e+00 : f32
    %11 = vector.broadcast %cst_7 : f32 to vector<16x128xf32>
    %12 = arith.subf %10, %11 : vector<16x128xf32>
    %cst_8 = arith.constant 1.67326319 : f32
    %13 = vector.broadcast %cst_8 : f32 to vector<16x128xf32>
    %14 = arith.mulf %13, %12 : vector<16x128xf32>
    %15 = arith.addf %7, %14 : vector<16x128xf32>
    %16 = arith.truncf %15 : vector<16x128xf32> to vector<16x128xbf16>
    %c0_9 = arith.constant 0 : index
    %c0_10 = arith.constant 0 : index
    %17 = vector.load %arg4[%c0_9, %c0_10] : memref<128x128xbf16, #tpu.memory_space<vmem>>, vector<128x128xbf16>
    %cst_11 = arith.constant dense<0.000000e+00> : vector<16x128xf32>
    %18 = tpu.matmul %16, %17, %cst_11 {dimension_numbers = #tpu.dot_dimension_numbers<[1], [0], [0], [1], [0, 0, 1, 1], [], []>} : vector<16x128xbf16>, vector<128x128xbf16>, vector<16x128xf32> -> vector<16x128xf32>
    %c0_12 = arith.constant 0 : index
    %c0_13 = arith.constant 0 : index
    %19 = vector.load %arg5[%c0_12, %c0_13] : memref<1x128xf32, #tpu.memory_space<vmem>>, vector<1x128xf32>
    %20 = vector.broadcast %19 : vector<1x128xf32> to vector<16x128xf32>
    %21 = arith.addf %18, %20 : vector<16x128xf32>
    %cst_14 = arith.constant 0.000000e+00 : f32
    %22 = vector.broadcast %cst_14 : f32 to vector<16x128xf32>
    %23 = arith.maximumf %21, %22 : vector<16x128xf32>
    %cst_15 = arith.constant 0.000000e+00 : f32
    %24 = vector.broadcast %cst_15 : f32 to vector<16x128xf32>
    %25 = arith.minimumf %21, %24 : vector<16x128xf32>
    %26 = math.exp %25 : vector<16x128xf32>
    %cst_16 = arith.constant 1.000000e+00 : f32
    %27 = vector.broadcast %cst_16 : f32 to vector<16x128xf32>
    %28 = arith.subf %26, %27 : vector<16x128xf32>
    %cst_17 = arith.constant 1.67326319 : f32
    %29 = vector.broadcast %cst_17 : f32 to vector<16x128xf32>
    %30 = arith.mulf %29, %28 : vector<16x128xf32>
    %31 = arith.addf %23, %30 : vector<16x128xf32>
    %32 = arith.truncf %31 : vector<16x128xf32> to vector<16x128xbf16>
    %c0_18 = arith.constant 0 : index
    %c0_19 = arith.constant 0 : index
    %33 = vector.load %arg6[%c0_18, %c0_19] : memref<128x128xbf16, #tpu.memory_space<vmem>>, vector<128x128xbf16>
    %cst_20 = arith.constant dense<0.000000e+00> : vector<16x128xf32>
    %34 = tpu.matmul %32, %33, %cst_20 {dimension_numbers = #tpu.dot_dimension_numbers<[1], [0], [0], [1], [0, 0, 1, 1], [], []>} : vector<16x128xbf16>, vector<128x128xbf16>, vector<16x128xf32> -> vector<16x128xf32>
    %c0_21 = arith.constant 0 : index
    %c0_22 = arith.constant 0 : index
    %35 = vector.load %arg7[%c0_21, %c0_22] : memref<1x128xf32, #tpu.memory_space<vmem>>, vector<1x128xf32>
    %36 = vector.broadcast %35 : vector<1x128xf32> to vector<16x128xf32>
    %37 = arith.addf %34, %36 : vector<16x128xf32>
    %cst_23 = arith.constant 0.000000e+00 : f32
    %38 = vector.broadcast %cst_23 : f32 to vector<16x128xf32>
    %39 = arith.maximumf %37, %38 : vector<16x128xf32>
    %cst_24 = arith.constant 0.000000e+00 : f32
    %40 = vector.broadcast %cst_24 : f32 to vector<16x128xf32>
    %41 = arith.minimumf %37, %40 : vector<16x128xf32>
    %42 = math.exp %41 : vector<16x128xf32>
    %cst_25 = arith.constant 1.000000e+00 : f32
    %43 = vector.broadcast %cst_25 : f32 to vector<16x128xf32>
    %44 = arith.subf %42, %43 : vector<16x128xf32>
    %cst_26 = arith.constant 1.67326319 : f32
    %45 = vector.broadcast %cst_26 : f32 to vector<16x128xf32>
    %46 = arith.mulf %45, %44 : vector<16x128xf32>
    %47 = arith.addf %39, %46 : vector<16x128xf32>
    %48 = arith.truncf %47 : vector<16x128xf32> to vector<16x128xbf16>
    %c0_27 = arith.constant 0 : index
    %c0_28 = arith.constant 0 : index
    %49 = vector.load %arg8[%c0_27, %c0_28] : memref<128x128xbf16, #tpu.memory_space<vmem>>, vector<128x128xbf16>
    %cst_29 = arith.constant dense<0.000000e+00> : vector<16x128xf32>
    %50 = tpu.matmul %48, %49, %cst_29 {dimension_numbers = #tpu.dot_dimension_numbers<[1], [0], [0], [1], [0, 0, 1, 1], [], []>} : vector<16x128xbf16>, vector<128x128xbf16>, vector<16x128xf32> -> vector<16x128xf32>
    %c0_30 = arith.constant 0 : index
    %c0_31 = arith.constant 0 : index
    %51 = vector.load %arg9[%c0_30, %c0_31] : memref<1x128xf32, #tpu.memory_space<vmem>>, vector<1x128xf32>
    %52 = vector.broadcast %51 : vector<1x128xf32> to vector<16x128xf32>
    %53 = arith.addf %50, %52 : vector<16x128xf32>
    %cst_32 = arith.constant 0.000000e+00 : f32
    %54 = vector.broadcast %cst_32 : f32 to vector<16x128xf32>
    %55 = arith.maximumf %53, %54 : vector<16x128xf32>
    %cst_33 = arith.constant 0.000000e+00 : f32
    %56 = vector.broadcast %cst_33 : f32 to vector<16x128xf32>
    %57 = arith.minimumf %53, %56 : vector<16x128xf32>
    %58 = math.exp %57 : vector<16x128xf32>
    %cst_34 = arith.constant 1.000000e+00 : f32
    %59 = vector.broadcast %cst_34 : f32 to vector<16x128xf32>
    %60 = arith.subf %58, %59 : vector<16x128xf32>
    %cst_35 = arith.constant 1.67326319 : f32
    %61 = vector.broadcast %cst_35 : f32 to vector<16x128xf32>
    %62 = arith.mulf %61, %60 : vector<16x128xf32>
    %63 = arith.addf %55, %62 : vector<16x128xf32>
    %64 = arith.truncf %63 : vector<16x128xf32> to vector<16x128xbf16>
    %c0_36 = arith.constant 0 : index
    %c0_37 = arith.constant 0 : index
    %65 = vector.load %arg10[%c0_36, %c0_37] : memref<128x128xbf16, #tpu.memory_space<vmem>>, vector<128x128xbf16>
    %cst_38 = arith.constant dense<0.000000e+00> : vector<16x128xf32>
    %66 = tpu.matmul %64, %65, %cst_38 {dimension_numbers = #tpu.dot_dimension_numbers<[1], [0], [0], [1], [0, 0, 1, 1], [], []>} : vector<16x128xbf16>, vector<128x128xbf16>, vector<16x128xf32> -> vector<16x128xf32>
    %c0_39 = arith.constant 0 : index
    %c0_40 = arith.constant 0 : index
    %67 = vector.load %arg11[%c0_39, %c0_40] : memref<1x128xf32, #tpu.memory_space<vmem>>, vector<1x128xf32>
    %68 = vector.broadcast %67 : vector<1x128xf32> to vector<16x128xf32>
    %69 = arith.addf %66, %68 : vector<16x128xf32>
    %cst_41 = arith.constant 0.000000e+00 : f32
    %70 = vector.broadcast %cst_41 : f32 to vector<16x128xf32>
    %71 = arith.maximumf %69, %70 : vector<16x128xf32>
    %cst_42 = arith.constant 0.000000e+00 : f32
    %72 = vector.broadcast %cst_42 : f32 to vector<16x128xf32>
    %73 = arith.minimumf %69, %72 : vector<16x128xf32>
    %74 = math.exp %73 : vector<16x128xf32>
    %cst_43 = arith.constant 1.000000e+00 : f32
    %75 = vector.broadcast %cst_43 : f32 to vector<16x128xf32>
    %76 = arith.subf %74, %75 : vector<16x128xf32>
    %cst_44 = arith.constant 1.67326319 : f32
    %77 = vector.broadcast %cst_44 : f32 to vector<16x128xf32>
    %78 = arith.mulf %77, %76 : vector<16x128xf32>
    %79 = arith.addf %71, %78 : vector<16x128xf32>
    %80 = arith.truncf %79 : vector<16x128xf32> to vector<16x128xbf16>
    %c0_45 = arith.constant 0 : index
    %c0_46 = arith.constant 0 : index
    %81 = vector.load %arg12[%c0_45, %c0_46] : memref<128x128xbf16, #tpu.memory_space<vmem>>, vector<128x128xbf16>
    %cst_47 = arith.constant dense<0.000000e+00> : vector<16x128xf32>
    %82 = tpu.matmul %80, %81, %cst_47 {dimension_numbers = #tpu.dot_dimension_numbers<[1], [0], [0], [1], [0, 0, 1, 1], [], []>} : vector<16x128xbf16>, vector<128x128xbf16>, vector<16x128xf32> -> vector<16x128xf32>
    %c0_48 = arith.constant 0 : index
    %c0_49 = arith.constant 0 : index
    %83 = vector.load %arg13[%c0_48, %c0_49] : memref<1x128xf32, #tpu.memory_space<vmem>>, vector<1x128xf32>
    %84 = vector.broadcast %83 : vector<1x128xf32> to vector<16x128xf32>
    %85 = arith.addf %82, %84 : vector<16x128xf32>
    %c0_50 = arith.constant 0 : index
    %c0_51 = arith.constant 0 : index
    %86 = vector.load %arg14[%c0_50, %c0_51] : memref<16x128xf32, #tpu.memory_space<vmem>>, vector<16x128xf32>
    tpu.vector_store %arg14[%c0_50, %c0_51], %85 {strides = array<i32>} : memref<16x128xf32, #tpu.memory_space<vmem>>, vector<16x128xf32>,
    return
  }
  func.func @transform_0(%arg0: i32) -> (i32, i32) {
    %c0_i32 = arith.constant 0 : i32
    %c0_i32_0 = arith.constant 0 : i32
    return %arg0, %c0_i32 : i32, i32
  }
  func.func @transform_1(%arg0: i32) -> (i32, i32) {
    %c0_i32 = arith.constant 0 : i32
    %c0_i32_0 = arith.constant 0 : i32
    %c0_i32_1 = arith.constant 0 : i32
    return %c0_i32, %c0_i32_0 : i32, i32
  }
  func.func @transform_2(%arg0: i32) -> (i32, i32) {
    %c0_i32 = arith.constant 0 : i32
    %c0_i32_0 = arith.constant 0 : i32
    %c0_i32_1 = arith.constant 0 : i32
    return %c0_i32, %c0_i32_0 : i32, i32
  }
  func.func @transform_3(%arg0: i32) -> (i32, i32) {
    %c0_i32 = arith.constant 0 : i32
    %c0_i32_0 = arith.constant 0 : i32
    %c0_i32_1 = arith.constant 0 : i32
    return %c0_i32, %c0_i32_0 : i32, i32
  }
  func.func @transform_4(%arg0: i32) -> (i32, i32) {
    %c0_i32 = arith.constant 0 : i32
    %c0_i32_0 = arith.constant 0 : i32
    %c0_i32_1 = arith.constant 0 : i32
    return %c0_i32, %c0_i32_0 : i32, i32
  }
  func.func @transform_5(%arg0: i32) -> (i32, i32) {
    %c0_i32 = arith.constant 0 : i32
    %c0_i32_0 = arith.constant 0 : i32
    %c0_i32_1 = arith.constant 0 : i32
    return %c0_i32, %c0_i32_0 : i32, i32
  }
  func.func @transform_6(%arg0: i32) -> (i32, i32) {
    %c0_i32 = arith.constant 0 : i32
    %c0_i32_0 = arith.constant 0 : i32
    %c0_i32_1 = arith.constant 0 : i32
    return %c0_i32, %c0_i32_0 : i32, i32
  }
  func.func @transform_7(%arg0: i32) -> (i32, i32) {
    %c0_i32 = arith.constant 0 : i32
    %c0_i32_0 = arith.constant 0 : i32
    %c0_i32_1 = arith.constant 0 : i32
    return %c0_i32, %c0_i32_0 : i32, i32
  }
  func.func @transform_8(%arg0: i32) -> (i32, i32) {
    %c0_i32 = arith.constant 0 : i32
    %c0_i32_0 = arith.constant 0 : i32
    %c0_i32_1 = arith.constant 0 : i32
    return %c0_i32, %c0_i32_0 : i32, i32
  }
  func.func @transform_9(%arg0: i32) -> (i32, i32) {
    %c0_i32 = arith.constant 0 : i32
    %c0_i32_0 = arith.constant 0 : i32
    %c0_i32_1 = arith.constant 0 : i32
    return %c0_i32, %c0_i32_0 : i32, i32
  }
  func.func @transform_10(%arg0: i32) -> (i32, i32) {
    %c0_i32 = arith.constant 0 : i32
    %c0_i32_0 = arith.constant 0 : i32
    %c0_i32_1 = arith.constant 0 : i32
    return %c0_i32, %c0_i32_0 : i32, i32
  }
  func.func @transform_11(%arg0: i32) -> (i32, i32) {
    %c0_i32 = arith.constant 0 : i32
    %c0_i32_0 = arith.constant 0 : i32
    %c0_i32_1 = arith.constant 0 : i32
    return %c0_i32, %c0_i32_0 : i32, i32
  }
  func.func @transform_12(%arg0: i32) -> (i32, i32) {
    %c0_i32 = arith.constant 0 : i32
    %c0_i32_0 = arith.constant 0 : i32
    %c0_i32_1 = arith.constant 0 : i32
    return %c0_i32, %c0_i32_0 : i32, i32
  }
  func.func @transform_13(%arg0: i32) -> (i32, i32) {
    %c0_i32 = arith.constant 0 : i32
    %c0_i32_0 = arith.constant 0 : i32
    return %arg0, %c0_i32 : i32, i32
  }
}

</mosaic_0001>

<llo_original>
// kernel: _forward_padded.1
$region0: #{_forward_padded.1}
  #allocation0 [shape = 'u32[]', space=smem, size = 0x4, offset = 0x4, fixed_abs, tag = 'smem constant byte address 0x4 - core index']
  #allocation1 [shape = 'u32[144,128]{1,0:T(1,128)}', space=vmem, size = 0x12000, scoped, tag = 'internal scratch']
  %s0 = inlined_call_operand.hbm [shape: bf16[16,128], index: 0, kind: input, shape index: {}]
  %s1 = inlined_call_operand.hbm [shape: bf16[128,128], index: 1, kind: input, shape index: {}]
  %s2 = inlined_call_operand.vmem [shape: bf16[1,128], index: 2, kind: input, shape index: {}]
  %s3 = inlined_call_operand.hbm [shape: bf16[128,128], index: 3, kind: input, shape index: {}]
  %s4 = inlined_call_operand.vmem [shape: bf16[1,128], index: 4, kind: input, shape index: {}]
  %s5 = inlined_call_operand.hbm [shape: bf16[128,128], index: 5, kind: input, shape index: {}]
  %s6 = inlined_call_operand.vmem [shape: bf16[1,128], index: 6, kind: input, shape index: {}]
  %s7 = inlined_call_operand.hbm [shape: bf16[128,128], index: 7, kind: input, shape index: {}]
  %s8 = inlined_call_operand.vmem [shape: bf16[1,128], index: 8, kind: input, shape index: {}]
  %s9 = inlined_call_operand.hbm [shape: bf16[128,128], index: 9, kind: input, shape index: {}]
  %s10 = inlined_call_operand.vmem [shape: bf16[1,128], index: 10, kind: input, shape index: {}]
  %s11 = inlined_call_operand.hbm [shape: bf16[128,128], index: 11, kind: input, shape index: {}]
  %s12 = inlined_call_operand.vmem [shape: f32[1,128], index: 12, kind: input, shape index: {}]
  %s13 = inlined_call_operand.hbm [shape: f32[16,128], index: 13, kind: output, shape index: {}]
  %s14 = sld [smem:[#allocation0]]
  $region90: #{_forward_padded.1} parent=0
    _
  %s16 = ssub.s32 1, %s14
  %s17 = scalar_select 0, %s16, %s14
  $region1: #{_forward_padded.1} parent=0
    #allocation2 [shape = 'u8[4096]{0}', space=vmem, size = 0x1000, scoped, tag = 'input window, operand 0, single buffered']
    #allocation3 [shape = 's32[1]{0}', space=sflag, size = 0x4, scoped, tag = 'scoped memory for _forward_padded.1']
    #allocation4 [shape = 's32[1]{0}', space=sflag, size = 0x4, scoped, tag = 'scoped memory for _forward_padded.1']
    #allocation5 [shape = 'u8[32768]{0}', space=vmem, size = 0x8000, scoped, tag = 'input window, operand 1, single buffered']
    #allocation6 [shape = 's32[1]{0}', space=sflag, size = 0x4, scoped, tag = 'scoped memory for _forward_padded.1']
    #allocation7 [shape = 'u8[32768]{0}', space=vmem, size = 0x8000, scoped, tag = 'input window, operand 3, single buffered']
    #allocation8 [shape = 'u8[32768]{0}', space=vmem, size = 0x8000, scoped, tag = 'input window, operand 5, single buffered']
    #allocation9 [shape = 's32[1]{0}', space=sflag, size = 0x4, scoped, tag = 'scoped memory for _forward_padded.1']
    #allocation10 [shape = 'u8[32768]{0}', space=vmem, size = 0x8000, scoped, tag = 'input window, operand 7, single buffered']
    #allocation11 [shape = 'u8[32768]{0}', space=vmem, size = 0x8000, scoped, tag = 'input window, operand 9, single buffered']
    #allocation12 [shape = 's32[1]{0}', space=sflag, size = 0x4, scoped, tag = 'scoped memory for _forward_padded.1']
    #allocation13 [shape = 'u8[32768]{0}', space=vmem, size = 0x8000, scoped, tag = 'input window, operand 11, single buffered']
    #allocation14 [shape = 'u8[8192]{0}', space=vmem, size = 0x2000, scoped, tag = 'output window, operand 0, single buffered']
    %18 = vsyncpa [#allocation3], 0
    %19 = vsyncpa [#allocation6], 0
    %20 = vsyncpa [#allocation9], 0
    %21 = vsyncpa [#allocation12], 0
    %22 = vsyncpa [#allocation4], 0
    // Predicated region
    $region2: #{_forward_padded.1} parent=1 // pred_check
      _
    $region3: #{_forward_padded.1} parent=1 // pred_check_branch
      %24 = sbr.rel (0) target = $region5
    $region4: #{_forward_padded.1} parent=1 // pred_region
      %s26 = ssub.s32 128, 128
      %27 = vsyncadd [#allocation3], %s26
      %s28 = sshll.u32 [#allocation2], 4
      %s29 = int_to_ptr.vmem [resolvable:$true] %s28
      %34 = dma.hbm_to_vmem [thread:$0]  %s0, 128, %s29, [#allocation3], 64, 64, 4
    $region5: #{_forward_padded.1} parent=1 // pred_fallthru
      _
    // Predicated region
    $region6: #{_forward_padded.1} parent=1 // pred_check
      _
    $region7: #{_forward_padded.1} parent=1 // pred_check_branch
      %36 = sbr.rel (0) target = $region9
    $region8: #{_forward_padded.1} parent=1 // pred_region
      %s38 = ssub.s32 1024, 1024
      %39 = vsyncadd [#allocation6], %s38
      %s40 = sshll.u32 [#allocation5], 4
      %s41 = int_to_ptr.vmem [resolvable:$true] %s40
      %46 = dma.hbm_to_vmem [thread:$0]  %s1, 1024, %s41, [#allocation6], 64, 64, 4
    $region9: #{_forward_padded.1} parent=1 // pred_fallthru
      _
    // Predicated region
    $region10: #{_forward_padded.1} parent=1 // pred_check
      _
    $region11: #{_forward_padded.1} parent=1 // pred_check_branch
      %48 = sbr.rel (0) target = $region13
    $region12: #{_forward_padded.1} parent=1 // pred_region
      _
    $region13: #{_forward_padded.1} parent=1 // pred_fallthru
      _
    // Predicated region
    $region14: #{_forward_padded.1} parent=1 // pred_check
      _
    $region15: #{_forward_padded.1} parent=1 // pred_check_branch
      %50 = sbr.rel (0) target = $region17
    $region16: #{_forward_padded.1} parent=1 // pred_region
      %s52 = ssub.s32 1024, 1024
      %53 = vsyncadd [#allocation6], %s52
      %s54 = sshll.u32 [#allocation7], 4
      %s55 = int_to_ptr.vmem [resolvable:$true] %s54
      %60 = dma.hbm_to_vmem [thread:$0]  %s3, 1024, %s55, [#allocation6], 64, 64, 4
    $region17: #{_forward_padded.1} parent=1 // pred_fallthru
      _
    // Predicated region
    $region18: #{_forward_padded.1} parent=1 // pred_check
      _
    $region19: #{_forward_padded.1} parent=1 // pred_check_branch
      %62 = sbr.rel (0) target = $region21
    $region20: #{_forward_padded.1} parent=1 // pred_region
      _
    $region21: #{_forward_padded.1} parent=1 // pred_fallthru
      _
    // Predicated region
    $region22: #{_forward_padded.1} parent=1 // pred_check
      _
    $region23: #{_forward_padded.1} parent=1 // pred_check_branch
      %64 = sbr.rel (0) target = $region25
    $region24: #{_forward_padded.1} parent=1 // pred_region
      %s66 = ssub.s32 1024, 1024
      %67 = vsyncadd [#allocation9], %s66
      %s68 = sshll.u32 [#allocation8], 4
      %s69 = int_to_ptr.vmem [resolvable:$true] %s68
      %74 = dma.hbm_to_vmem [thread:$0]  %s5, 1024, %s69, [#allocation9], 64, 64, 4
    $region25: #{_forward_padded.1} parent=1 // pred_fallthru
      _
    // Predicated region
    $region26: #{_forward_padded.1} parent=1 // pred_check
      _
    $region27: #{_forward_padded.1} parent=1 // pred_check_branch
      %76 = sbr.rel (0) target = $region29
    $region28: #{_forward_padded.1} parent=1 // pred_region
      _
    $region29: #{_forward_padded.1} parent=1 // pred_fallthru
      _
    // Predicated region
    $region30: #{_forward_padded.1} parent=1 // pred_check
      _
    $region31: #{_forward_padded.1} parent=1 // pred_check_branch
      %78 = sbr.rel (0) target = $region33
    $region32: #{_forward_padded.1} parent=1 // pred_region
      %s80 = ssub.s32 1024, 1024
      %81 = vsyncadd [#allocation9], %s80
      %s82 = sshll.u32 [#allocation10], 4
      %s83 = int_to_ptr.vmem [resolvable:$true] %s82
      %88 = dma.hbm_to_vmem [thread:$0]  %s7, 1024, %s83, [#allocation9], 64, 64, 4
    $region33: #{_forward_padded.1} parent=1 // pred_fallthru
      _
    // Predicated region
    $region34: #{_forward_padded.1} parent=1 // pred_check
      _
    $region35: #{_forward_padded.1} parent=1 // pred_check_branch
      %90 = sbr.rel (0) target = $region37
    $region36: #{_forward_padded.1} parent=1 // pred_region
      _
    $region37: #{_forward_padded.1} parent=1 // pred_fallthru
      _
    // Predicated region
    $region38: #{_forward_padded.1} parent=1 // pred_check
      _
    $region39: #{_forward_padded.1} parent=1 // pred_check_branch
      %92 = sbr.rel (0) target = $region41
    $region40: #{_forward_padded.1} parent=1 // pred_region
      %s94 = ssub.s32 1024, 1024
      %95 = vsyncadd [#allocation12], %s94
      %s96 = sshll.u32 [#allocation11], 4
      %s97 = int_to_ptr.vmem [resolvable:$true] %s96
      %102 = dma.hbm_to_vmem [thread:$0]  %s9, 1024, %s97, [#allocation12], 64, 64, 4
    $region41: #{_forward_padded.1} parent=1 // pred_fallthru
      _
    // Predicated region
    $region42: #{_forward_padded.1} parent=1 // pred_check
      _
    $region43: #{_forward_padded.1} parent=1 // pred_check_branch
      %104 = sbr.rel (0) target = $region45
    $region44: #{_forward_padded.1} parent=1 // pred_region
      _
    $region45: #{_forward_padded.1} parent=1 // pred_fallthru
      _
    // Predicated region
    $region46: #{_forward_padded.1} parent=1 // pred_check
      _
    $region47: #{_forward_padded.1} parent=1 // pred_check_branch
      %106 = sbr.rel (0) target = $region49
    $region48: #{_forward_padded.1} parent=1 // pred_region
      %s108 = ssub.s32 1024, 1024
      %109 = vsyncadd [#allocation12], %s108
      %s110 = sshll.u32 [#allocation13], 4
      %s111 = int_to_ptr.vmem [resolvable:$true] %s110
      %116 = dma.hbm_to_vmem [thread:$0]  %s11, 1024, %s111, [#allocation12], 64, 64, 4
    $region49: #{_forward_padded.1} parent=1 // pred_fallthru
      _
    // Predicated region
    $region50: #{_forward_padded.1} parent=1 // pred_check
      _
    $region51: #{_forward_padded.1} parent=1 // pred_check_branch
      %118 = sbr.rel (0) target = $region53
    $region52: #{_forward_padded.1} parent=1 // pred_region
      _
    $region53: #{_forward_padded.1} parent=1 // pred_fallthru
      _
    // Predicated region
    $region54: #{_forward_padded.1} parent=1 // pred_check
      _
    $region55: #{_forward_padded.1} parent=1 // pred_check_branch
      %120 = sbr.rel (0) target = $region57
    $region56: #{_forward_padded.1} parent=1 // pred_region
      %121 = dma.done [#allocation3], 128
    $region57: #{_forward_padded.1} parent=1 // pred_fallthru
      _
    // Predicated region
    $region58: #{_forward_padded.1} parent=1 // pred_check
      _
    $region59: #{_forward_padded.1} parent=1 // pred_check_branch
      %123 = sbr.rel (0) target = $region61
    $region60: #{_forward_padded.1} parent=1 // pred_region
      %124 = dma.done [#allocation6], 1024
    $region61: #{_forward_padded.1} parent=1 // pred_fallthru
      _
    // Predicated region
    $region62: #{_forward_padded.1} parent=1 // pred_check
      _
    $region63: #{_forward_padded.1} parent=1 // pred_check_branch
      %126 = sbr.rel (0) target = $region65
    $region64: #{_forward_padded.1} parent=1 // pred_region
      %127 = dma.done [#allocation6], 1024
    $region65: #{_forward_padded.1} parent=1 // pred_fallthru
      _
    // Predicated region
    $region66: #{_forward_padded.1} parent=1 // pred_check
      _
    $region67: #{_forward_padded.1} parent=1 // pred_check_branch
      %129 = sbr.rel (0) target = $region69
    $region68: #{_forward_padded.1} parent=1 // pred_region
      %130 = dma.done [#allocation9], 1024
    $region69: #{_forward_padded.1} parent=1 // pred_fallthru
      _
    // Predicated region
    $region70: #{_forward_padded.1} parent=1 // pred_check
      _
    $region71: #{_forward_padded.1} parent=1 // pred_check_branch
      %132 = sbr.rel (0) target = $region73
    $region72: #{_forward_padded.1} parent=1 // pred_region
      %133 = dma.done [#allocation9], 1024
    $region73: #{_forward_padded.1} parent=1 // pred_fallthru
      _
    // Predicated region
    $region74: #{_forward_padded.1} parent=1 // pred_check
      _
    $region75: #{_forward_padded.1} parent=1 // pred_check_branch
      %135 = sbr.rel (0) target = $region77
    $region76: #{_forward_padded.1} parent=1 // pred_region
      %136 = dma.done [#allocation12], 1024
    $region77: #{_forward_padded.1} parent=1 // pred_fallthru
      _
    // Predicated region
    $region78: #{_forward_padded.1} parent=1 // pred_check
      _
    $region79: #{_forward_padded.1} parent=1 // pred_check_branch
      %138 = sbr.rel (0) target = $region81
    $region80: #{_forward_padded.1} parent=1 // pred_region
      %139 = dma.done [#allocation12], 1024
    $region81: #{_forward_padded.1} parent=1 // pred_fallthru
      _
    %v143 = vld [vmem:[#allocation2] sm:$0xf]
    %v144 = vld [vmem:[#allocation2 + $0x4] sm:$0xf]
    %v145 = vld [vmem:[#allocation5] sm:$0xf]
    %v146 = vld [vmem:[#allocation5 + $0x4] sm:$0xf]
    %v147 = vld [vmem:[#allocation5 + $0x8] sm:$0xf]
    %v148 = vld [vmem:[#allocation5 + $0xc] sm:$0xf]
    %v149 = vld [vmem:[#allocation5 + $0x10] sm:$0xf]
    %v150 = vld [vmem:[#allocation5 + $0x14] sm:$0xf]
    %v151 = vld [vmem:[#allocation5 + $0x18] sm:$0xf]
    %v152 = vld [vmem:[#allocation5 + $0x1c] sm:$0xf]
    %v153 = vld [vmem:[#allocation5 + $0x20] sm:$0xf]
    %v154 = vld [vmem:[#allocation5 + $0x24] sm:$0xf]
    %v155 = vld [vmem:[#allocation5 + $0x28] sm:$0xf]
    %v156 = vld [vmem:[#allocation5 + $0x2c] sm:$0xf]
    %v157 = vld [vmem:[#allocation5 + $0x30] sm:$0xf]
    %v158 = vld [vmem:[#allocation5 + $0x34] sm:$0xf]
    %v159 = vld [vmem:[#allocation5 + $0x38] sm:$0xf]
    %v160 = vld [vmem:[#allocation5 + $0x3c] sm:$0xf]
    %v163 = vunpack.c.l.b16 %v143
    %v164 = vunpack.c.l.b16 %v144
    %v165 = vpack.c.b16 %v164, %v163
    %v183 = vunpack.c.l.b16 %v145
    %v184 = vunpack.c.l.b16 %v146
    %v185 = vunpack.c.l.b16 %v147
    %v186 = vunpack.c.l.b16 %v148
    %v187 = vunpack.c.l.b16 %v149
    %v188 = vunpack.c.l.b16 %v150
    %v189 = vunpack.c.l.b16 %v151
    %v190 = vunpack.c.l.b16 %v152
    %v191 = vunpack.c.l.b16 %v153
    %v192 = vunpack.c.l.b16 %v154
    %v193 = vunpack.c.l.b16 %v155
    %v194 = vunpack.c.l.b16 %v156
    %v195 = vunpack.c.l.b16 %v157
    %v196 = vunpack.c.l.b16 %v158
    %v197 = vunpack.c.l.b16 %v159
    %v198 = vunpack.c.l.b16 %v160
    %v199 = vpack.c.b16 %v184, %v183
    %v200 = vpack.c.b16 %v186, %v185
    %v201 = vpack.c.b16 %v188, %v187
    %v202 = vpack.c.b16 %v190, %v189
    %v203 = vpack.c.b16 %v192, %v191
    %v204 = vpack.c.b16 %v194, %v193
    %v205 = vpack.c.b16 %v196, %v195
    %v206 = vpack.c.b16 %v198, %v197
    %215 = vmatprep.subr.bf16.mxu0 0
    %216 = vmatpush1.bf16.msra.mxu0 %v206
    %217 = vmatprep.subr.bf16.mxu0 0
    %218 = vmatpush1.bf16.msra.mxu0 %v205
    %219 = vmatprep.subr.bf16.mxu0 0
    %220 = vmatpush1.bf16.msra.mxu0 %v204
    %221 = vmatprep.subr.bf16.mxu0 0
    %222 = vmatpush1.bf16.msra.mxu0 %v203
    %223 = vmatprep.subr.bf16.mxu0 0
    %224 = vmatpush1.bf16.msra.mxu0 %v202
    %225 = vmatprep.subr.bf16.mxu0 0
    %226 = vmatpush1.bf16.msra.mxu0 %v201
    %227 = vmatprep.subr.bf16.mxu0 0
    %228 = vmatpush1.bf16.msra.mxu0 %v200
    %229 = vmatprep.subr.bf16.mxu0 0
    %230 = vmatpush1.bf16.msra.mxu0 %v199
    %231 = vmatprep.subr.bf16.mxu0 0
    %232 = vmatpush2.bf16.msra.mxu0 0
    %233 = vmatprep.subr.bf16.mxu0 0
    %234 = vmatpush2.bf16.msra.mxu0 0
    %235 = vmatprep.subr.bf16.mxu0 0
    %236 = vmatpush2.bf16.msra.mxu0 0
    %237 = vmatprep.subr.bf16.mxu0 0
    %238 = vmatpush2.bf16.msra.mxu0 0
    %239 = vmatprep.subr.bf16.mxu0 0
    %240 = vmatpush2.bf16.msra.mxu0 0
    %241 = vmatprep.subr.bf16.mxu0 0
    %242 = vmatpush2.bf16.msra.mxu0 0
    %243 = vmatprep.subr.bf16.mxu0 0
    %244 = vmatpush2.bf16.msra.mxu0 0
    %245 = vmatprep.subr.bf16.mxu0 0
    %246 = vmatpush2.bf16.msra.mxu0 0
    %247 = vmatprep.mubr.bf16.mxu0 0
    %248 = vmatmul.mubr.bf16.gmra.mxu0 %v165
    %v249 = vpop.f32.mrf.mxu0
    %v250 = vadd.f32 0.0, %v249
    %v251 = vpop.f32.mrf.mxu0
    %v252 = vpop.f32.mrf.mxu0
    %v253 = vadd.f32 0.0, %v252
    %v254 = vpop.f32.mrf.mxu0
    %255 = vdwg.mxu0
    %v256 = vpack.c.bf16 %v253, %v250
    %v257 = vld [vmem:[%s2] sm:$0x1]
    %v259 = vpack.i.b16 %v257, %v257
    %v261 = vlaneseq
    %v262 = vshrl.u32 %v261, 7
    %v263 = vsub.s32 0, %v262
    %v264 = vrot.slane %v259, %v263
    %v265 = vadd.bf16 %v256, %v264
    %v266 = vmax.bf16 %v265, 0
    %v267 = vmin.bf16 %v265, 0
    %v269 = vmul.bf16 %v267, 1069105081
    %v270 = vpow.bf16.pop %v269
    %v271 = vsub.bf16 %v270, 1065369472
    %v272 = vmul.bf16 %v271, 1071005654
    %v273 = vadd.bf16 %v266, %v272
    %v274 = vld [vmem:[#allocation7] sm:$0xf]
    %v275 = vld [vmem:[#allocation7 + $0x4] sm:$0xf]
    %v276 = vld [vmem:[#allocation7 + $0x8] sm:$0xf]
    %v277 = vld [vmem:[#allocation7 + $0xc] sm:$0xf]
    %v278 = vld [vmem:[#allocation7 + $0x10] sm:$0xf]
    %v279 = vld [vmem:[#allocation7 + $0x14] sm:$0xf]
    %v280 = vld [vmem:[#allocation7 + $0x18] sm:$0xf]
    %v281 = vld [vmem:[#allocation7 + $0x1c] sm:$0xf]
    %v282 = vld [vmem:[#allocation7 + $0x20] sm:$0xf]
    %v283 = vld [vmem:[#allocation7 + $0x24] sm:$0xf]
    %v284 = vld [vmem:[#allocation7 + $0x28] sm:$0xf]
    %v285 = vld [vmem:[#allocation7 + $0x2c] sm:$0xf]
    %v286 = vld [vmem:[#allocation7 + $0x30] sm:$0xf]
    %v287 = vld [vmem:[#allocation7 + $0x34] sm:$0xf]
    %v288 = vld [vmem:[#allocation7 + $0x38] sm:$0xf]
    %v289 = vld [vmem:[#allocation7 + $0x3c] sm:$0xf]
    %v306 = vunpack.c.l.b16 %v274
    %v307 = vunpack.c.l.b16 %v275
    %v308 = vunpack.c.l.b16 %v276
    %v309 = vunpack.c.l.b16 %v277
    %v310 = vunpack.c.l.b16 %v278
    %v311 = vunpack.c.l.b16 %v279
    %v312 = vunpack.c.l.b16 %v280
    %v313 = vunpack.c.l.b16 %v281
    %v314 = vunpack.c.l.b16 %v282
    %v315 = vunpack.c.l.b16 %v283
    %v316 = vunpack.c.l.b16 %v284
    %v317 = vunpack.c.l.b16 %v285
    %v318 = vunpack.c.l.b16 %v286
    %v319 = vunpack.c.l.b16 %v287
    %v320 = vunpack.c.l.b16 %v288
    %v321 = vunpack.c.l.b16 %v289
    %v322 = vpack.c.b16 %v307, %v306
    %v323 = vpack.c.b16 %v309, %v308
    %v324 = vpack.c.b16 %v311, %v310
    %v325 = vpack.c.b16 %v313, %v312
    %v326 = vpack.c.b16 %v315, %v314
    %v327 = vpack.c.b16 %v317, %v316
    %v328 = vpack.c.b16 %v319, %v318
    %v329 = vpack.c.b16 %v321, %v320
    %338 = vmatprep.subr.bf16.mxu0 0
    %339 = vmatpush1.bf16.msra.mxu0 %v329
    %340 = vmatprep.subr.bf16.mxu0 0
    %341 = vmatpush1.bf16.msra.mxu0 %v328
    %342 = vmatprep.subr.bf16.mxu0 0
    %343 = vmatpush1.bf16.msra.mxu0 %v327
    %344 = vmatprep.subr.bf16.mxu0 0
    %345 = vmatpush1.bf16.msra.mxu0 %v326
    %346 = vmatprep.subr.bf16.mxu0 0
    %347 = vmatpush1.bf16.msra.mxu0 %v325
    %348 = vmatprep.subr.bf16.mxu0 0
    %349 = vmatpush1.bf16.msra.mxu0 %v324
    %350 = vmatprep.subr.bf16.mxu0 0
    %351 = vmatpush1.bf16.msra.mxu0 %v323
    %352 = vmatprep.subr.bf16.mxu0 0
    %353 = vmatpush1.bf16.msra.mxu0 %v322
    %354 = vmatprep.subr.bf16.mxu0 0
    %355 = vmatpush2.bf16.msra.mxu0 0
    %356 = vmatprep.subr.bf16.mxu0 0
    %357 = vmatpush2.bf16.msra.mxu0 0
    %358 = vmatprep.subr.bf16.mxu0 0
    %359 = vmatpush2.bf16.msra.mxu0 0
    %360 = vmatprep.subr.bf16.mxu0 0
    %361 = vmatpush2.bf16.msra.mxu0 0
    %362 = vmatprep.subr.bf16.mxu0 0
    %363 = vmatpush2.bf16.msra.mxu0 0
    %364 = vmatprep.subr.bf16.mxu0 0
    %365 = vmatpush2.bf16.msra.mxu0 0
    %366 = vmatprep.subr.bf16.mxu0 0
    %367 = vmatpush2.bf16.msra.mxu0 0
    %368 = vmatprep.subr.bf16.mxu0 0
    %369 = vmatpush2.bf16.msra.mxu0 0
    %370 = vmatprep.mubr.bf16.mxu0 0
    %371 = vmatmul.mubr.bf16.gmra.mxu0 %v273
    %v372 = vpop.f32.mrf.mxu0
    %v373 = vadd.f32 0.0, %v372
    %v374 = vpop.f32.mrf.mxu0
    %v375 = vpop.f32.mrf.mxu0
    %v376 = vadd.f32 0.0, %v375
    %v377 = vpop.f32.mrf.mxu0
    %378 = vdwg.mxu0
    %v379 = vpack.c.bf16 %v376, %v373
    %v380 = vld [vmem:[%s4] sm:$0x1]
    %v382 = vpack.i.b16 %v380, %v380
    %v384 = vlaneseq
    %v385 = vshrl.u32 %v384, 7
    %v386 = vsub.s32 0, %v385
    %v387 = vrot.slane %v382, %v386
    %v388 = vadd.bf16 %v379, %v387
    %v389 = vmax.bf16 %v388, 0
    %v390 = vmin.bf16 %v388, 0
    %v392 = vmul.bf16 %v390, 1069105081
    %v393 = vpow.bf16.pop %v392
    %v394 = vsub.bf16 %v393, 1065369472
    %v395 = vmul.bf16 %v394, 1071005654
    %v396 = vadd.bf16 %v389, %v395
    %v397 = vld [vmem:[#allocation8] sm:$0xf]
    %v398 = vld [vmem:[#allocation8 + $0x4] sm:$0xf]
    %v399 = vld [vmem:[#allocation8 + $0x8] sm:$0xf]
    %v400 = vld [vmem:[#allocation8 + $0xc] sm:$0xf]
    %v401 = vld [vmem:[#allocation8 + $0x10] sm:$0xf]
    %v402 = vld [vmem:[#allocation8 + $0x14] sm:$0xf]
    %v403 = vld [vmem:[#allocation8 + $0x18] sm:$0xf]
    %v404 = vld [vmem:[#allocation8 + $0x1c] sm:$0xf]
    %v405 = vld [vmem:[#allocation8 + $0x20] sm:$0xf]
    %v406 = vld [vmem:[#allocation8 + $0x24] sm:$0xf]
    %v407 = vld [vmem:[#allocation8 + $0x28] sm:$0xf]
    %v408 = vld [vmem:[#allocation8 + $0x2c] sm:$0xf]
    %v409 = vld [vmem:[#allocation8 + $0x30] sm:$0xf]
    %v410 = vld [vmem:[#allocation8 + $0x34] sm:$0xf]
    %v411 = vld [vmem:[#allocation8 + $0x38] sm:$0xf]
    %v412 = vld [vmem:[#allocation8 + $0x3c] sm:$0xf]
    %v429 = vunpack.c.l.b16 %v397
    %v430 = vunpack.c.l.b16 %v398
    %v431 = vunpack.c.l.b16 %v399
    %v432 = vunpack.c.l.b16 %v400
    %v433 = vunpack.c.l.b16 %v401
    %v434 = vunpack.c.l.b16 %v402
    %v435 = vunpack.c.l.b16 %v403
    %v436 = vunpack.c.l.b16 %v404
    %v437 = vunpack.c.l.b16 %v405
    %v438 = vunpack.c.l.b16 %v406
    %v439 = vunpack.c.l.b16 %v407
    %v440 = vunpack.c.l.b16 %v408
    %v441 = vunpack.c.l.b16 %v409
    %v442 = vunpack.c.l.b16 %v410
    %v443 = vunpack.c.l.b16 %v411
    %v444 = vunpack.c.l.b16 %v412
    %v445 = vpack.c.b16 %v430, %v429
    %v446 = vpack.c.b16 %v432, %v431
    %v447 = vpack.c.b16 %v434, %v433
    %v448 = vpack.c.b16 %v436, %v435
    %v449 = vpack.c.b16 %v438, %v437
    %v450 = vpack.c.b16 %v440, %v439
    %v451 = vpack.c.b16 %v442, %v441
    %v452 = vpack.c.b16 %v444, %v443
    %461 = vmatprep.subr.bf16.mxu0 0
    %462 = vmatpush1.bf16.msra.mxu0 %v452
    %463 = vmatprep.subr.bf16.mxu0 0
    %464 = vmatpush1.bf16.msra.mxu0 %v451
    %465 = vmatprep.subr.bf16.mxu0 0
    %466 = vmatpush1.bf16.msra.mxu0 %v450
    %467 = vmatprep.subr.bf16.mxu0 0
    %468 = vmatpush1.bf16.msra.mxu0 %v449
    %469 = vmatprep.subr.bf16.mxu0 0
    %470 = vmatpush1.bf16.msra.mxu0 %v448
    %471 = vmatprep.subr.bf16.mxu0 0
    %472 = vmatpush1.bf16.msra.mxu0 %v447
    %473 = vmatprep.subr.bf16.mxu0 0
    %474 = vmatpush1.bf16.msra.mxu0 %v446
    %475 = vmatprep.subr.bf16.mxu0 0
    %476 = vmatpush1.bf16.msra.mxu0 %v445
    %477 = vmatprep.subr.bf16.mxu0 0
    %478 = vmatpush2.bf16.msra.mxu0 0
    %479 = vmatprep.subr.bf16.mxu0 0
    %480 = vmatpush2.bf16.msra.mxu0 0
    %481 = vmatprep.subr.bf16.mxu0 0
    %482 = vmatpush2.bf16.msra.mxu0 0
    %483 = vmatprep.subr.bf16.mxu0 0
    %484 = vmatpush2.bf16.msra.mxu0 0
    %485 = vmatprep.subr.bf16.mxu0 0
    %486 = vmatpush2.bf16.msra.mxu0 0
    %487 = vmatprep.subr.bf16.mxu0 0
    %488 = vmatpush2.bf16.msra.mxu0 0
    %489 = vmatprep.subr.bf16.mxu0 0
    %490 = vmatpush2.bf16.msra.mxu0 0
    %491 = vmatprep.subr.bf16.mxu0 0
    %492 = vmatpush2.bf16.msra.mxu0 0
    %493 = vmatprep.mubr.bf16.mxu0 0
    %494 = vmatmul.mubr.bf16.gmra.mxu0 %v396
    %v495 = vpop.f32.mrf.mxu0
    %v496 = vadd.f32 0.0, %v495
    %v497 = vpop.f32.mrf.mxu0
    %v498 = vpop.f32.mrf.mxu0
    %v499 = vadd.f32 0.0, %v498
    %v500 = vpop.f32.mrf.mxu0
    %501 = vdwg.mxu0
    %v502 = vpack.c.bf16 %v499, %v496
    %v503 = vld [vmem:[%s6] sm:$0x1]
    %v505 = vpack.i.b16 %v503, %v503
    %v507 = vlaneseq
    %v508 = vshrl.u32 %v507, 7
    %v509 = vsub.s32 0, %v508
    %v510 = vrot.slane %v505, %v509
    %v511 = vadd.bf16 %v502, %v510
    %v512 = vmax.bf16 %v511, 0
    %v513 = vmin.bf16 %v511, 0
    %v515 = vmul.bf16 %v513, 1069105081
    %v516 = vpow.bf16.pop %v515
    %v517 = vsub.bf16 %v516, 1065369472
    %v518 = vmul.bf16 %v517, 1071005654
    %v519 = vadd.bf16 %v512, %v518
    %v520 = vld [vmem:[#allocation10] sm:$0xf]
    %v521 = vld [vmem:[#allocation10 + $0x4] sm:$0xf]
    %v522 = vld [vmem:[#allocation10 + $0x8] sm:$0xf]
    %v523 = vld [vmem:[#allocation10 + $0xc] sm:$0xf]
    %v524 = vld [vmem:[#allocation10 + $0x10] sm:$0xf]
    %v525 = vld [vmem:[#allocation10 + $0x14] sm:$0xf]
    %v526 = vld [vmem:[#allocation10 + $0x18] sm:$0xf]
    %v527 = vld [vmem:[#allocation10 + $0x1c] sm:$0xf]
    %v528 = vld [vmem:[#allocation10 + $0x20] sm:$0xf]
    %v529 = vld [vmem:[#allocation10 + $0x24] sm:$0xf]
    %v530 = vld [vmem:[#allocation10 + $0x28] sm:$0xf]
    %v531 = vld [vmem:[#allocation10 + $0x2c] sm:$0xf]
    %v532 = vld [vmem:[#allocation10 + $0x30] sm:$0xf]
    %v533 = vld [vmem:[#allocation10 + $0x34] sm:$0xf]
    %v534 = vld [vmem:[#allocation10 + $0x38] sm:$0xf]
    %v535 = vld [vmem:[#allocation10 + $0x3c] sm:$0xf]
    %v552 = vunpack.c.l.b16 %v520
    %v553 = vunpack.c.l.b16 %v521
    %v554 = vunpack.c.l.b16 %v522
    %v555 = vunpack.c.l.b16 %v523
    %v556 = vunpack.c.l.b16 %v524
    %v557 = vunpack.c.l.b16 %v525
    %v558 = vunpack.c.l.b16 %v526
    %v559 = vunpack.c.l.b16 %v527
    %v560 = vunpack.c.l.b16 %v528
    %v561 = vunpack.c.l.b16 %v529
    %v562 = vunpack.c.l.b16 %v530
    %v563 = vunpack.c.l.b16 %v531
    %v564 = vunpack.c.l.b16 %v532
    %v565 = vunpack.c.l.b16 %v533
    %v566 = vunpack.c.l.b16 %v534
    %v567 = vunpack.c.l.b16 %v535
    %v568 = vpack.c.b16 %v553, %v552
    %v569 = vpack.c.b16 %v555, %v554
    %v570 = vpack.c.b16 %v557, %v556
    %v571 = vpack.c.b16 %v559, %v558
    %v572 = vpack.c.b16 %v561, %v560
    %v573 = vpack.c.b16 %v563, %v562
    %v574 = vpack.c.b16 %v565, %v564
    %v575 = vpack.c.b16 %v567, %v566
    %584 = vmatprep.subr.bf16.mxu0 0
    %585 = vmatpush1.bf16.msra.mxu0 %v575
    %586 = vmatprep.subr.bf16.mxu0 0
    %587 = vmatpush1.bf16.msra.mxu0 %v574
    %588 = vmatprep.subr.bf16.mxu0 0
    %589 = vmatpush1.bf16.msra.mxu0 %v573
    %590 = vmatprep.subr.bf16.mxu0 0
    %591 = vmatpush1.bf16.msra.mxu0 %v572
    %592 = vmatprep.subr.bf16.mxu0 0
    %593 = vmatpush1.bf16.msra.mxu0 %v571
    %594 = vmatprep.subr.bf16.mxu0 0
    %595 = vmatpush1.bf16.msra.mxu0 %v570
    %596 = vmatprep.subr.bf16.mxu0 0
    %597 = vmatpush1.bf16.msra.mxu0 %v569
    %598 = vmatprep.subr.bf16.mxu0 0
    %599 = vmatpush1.bf16.msra.mxu0 %v568
    %600 = vmatprep.subr.bf16.mxu0 0
    %601 = vmatpush2.bf16.msra.mxu0 0
    %602 = vmatprep.subr.bf16.mxu0 0
    %603 = vmatpush2.bf16.msra.mxu0 0
    %604 = vmatprep.subr.bf16.mxu0 0
    %605 = vmatpush2.bf16.msra.mxu0 0
    %606 = vmatprep.subr.bf16.mxu0 0
    %607 = vmatpush2.bf16.msra.mxu0 0
    %608 = vmatprep.subr.bf16.mxu0 0
    %609 = vmatpush2.bf16.msra.mxu0 0
    %610 = vmatprep.subr.bf16.mxu0 0
    %611 = vmatpush2.bf16.msra.mxu0 0
    %612 = vmatprep.subr.bf16.mxu0 0
    %613 = vmatpush2.bf16.msra.mxu0 0
    %614 = vmatprep.subr.bf16.mxu0 0
    %615 = vmatpush2.bf16.msra.mxu0 0
    %616 = vmatprep.mubr.bf16.mxu0 0
    %617 = vmatmul.mubr.bf16.gmra.mxu0 %v519
    %v618 = vpop.f32.mrf.mxu0
    %v619 = vadd.f32 0.0, %v618
    %v620 = vpop.f32.mrf.mxu0
    %v621 = vpop.f32.mrf.mxu0
    %v622 = vadd.f32 0.0, %v621
    %v623 = vpop.f32.mrf.mxu0
    %624 = vdwg.mxu0
    %v625 = vpack.c.bf16 %v622, %v619
    %v626 = vld [vmem:[%s8] sm:$0x1]
    %v628 = vpack.i.b16 %v626, %v626
    %v630 = vlaneseq
    %v631 = vshrl.u32 %v630, 7
    %v632 = vsub.s32 0, %v631
    %v633 = vrot.slane %v628, %v632
    %v634 = vadd.bf16 %v625, %v633
    %v635 = vmax.bf16 %v634, 0
    %v636 = vmin.bf16 %v634, 0
    %v638 = vmul.bf16 %v636, 1069105081
    %v639 = vpow.bf16.pop %v638
    %v640 = vsub.bf16 %v639, 1065369472
    %v641 = vmul.bf16 %v640, 1071005654
    %v642 = vadd.bf16 %v635, %v641
    %v643 = vld [vmem:[#allocation11] sm:$0xf]
    %v644 = vld [vmem:[#allocation11 + $0x4] sm:$0xf]
    %v645 = vld [vmem:[#allocation11 + $0x8] sm:$0xf]
    %v646 = vld [vmem:[#allocation11 + $0xc] sm:$0xf]
    %v647 = vld [vmem:[#allocation11 + $0x10] sm:$0xf]
    %v648 = vld [vmem:[#allocation11 + $0x14] sm:$0xf]
    %v649 = vld [vmem:[#allocation11 + $0x18] sm:$0xf]
    %v650 = vld [vmem:[#allocation11 + $0x1c] sm:$0xf]
    %v651 = vld [vmem:[#allocation11 + $0x20] sm:$0xf]
    %v652 = vld [vmem:[#allocation11 + $0x24] sm:$0xf]
    %v653 = vld [vmem:[#allocation11 + $0x28] sm:$0xf]
    %v654 = vld [vmem:[#allocation11 + $0x2c] sm:$0xf]
    %v655 = vld [vmem:[#allocation11 + $0x30] sm:$0xf]
    %v656 = vld [vmem:[#allocation11 + $0x34] sm:$0xf]
    %v657 = vld [vmem:[#allocation11 + $0x38] sm:$0xf]
    %v658 = vld [vmem:[#allocation11 + $0x3c] sm:$0xf]
    %v675 = vunpack.c.l.b16 %v643
    %v676 = vunpack.c.l.b16 %v644
    %v677 = vunpack.c.l.b16 %v645
    %v678 = vunpack.c.l.b16 %v646
    %v679 = vunpack.c.l.b16 %v647
    %v680 = vunpack.c.l.b16 %v648
    %v681 = vunpack.c.l.b16 %v649
    %v682 = vunpack.c.l.b16 %v650
    %v683 = vunpack.c.l.b16 %v651
    %v684 = vunpack.c.l.b16 %v652
    %v685 = vunpack.c.l.b16 %v653
    %v686 = vunpack.c.l.b16 %v654
    %v687 = vunpack.c.l.b16 %v655
    %v688 = vunpack.c.l.b16 %v656
    %v689 = vunpack.c.l.b16 %v657
    %v690 = vunpack.c.l.b16 %v658
    %v691 = vpack.c.b16 %v676, %v675
    %v692 = vpack.c.b16 %v678, %v677
    %v693 = vpack.c.b16 %v680, %v679
    %v694 = vpack.c.b16 %v682, %v681
    %v695 = vpack.c.b16 %v684, %v683
    %v696 = vpack.c.b16 %v686, %v685
    %v697 = vpack.c.b16 %v688, %v687
    %v698 = vpack.c.b16 %v690, %v689
    %707 = vmatprep.subr.bf16.mxu0 0
    %708 = vmatpush1.bf16.msra.mxu0 %v698
    %709 = vmatprep.subr.bf16.mxu0 0
    %710 = vmatpush1.bf16.msra.mxu0 %v697
    %711 = vmatprep.subr.bf16.mxu0 0
    %712 = vmatpush1.bf16.msra.mxu0 %v696
    %713 = vmatprep.subr.bf16.mxu0 0
    %714 = vmatpush1.bf16.msra.mxu0 %v695
    %715 = vmatprep.subr.bf16.mxu0 0
    %716 = vmatpush1.bf16.msra.mxu0 %v694
    %717 = vmatprep.subr.bf16.mxu0 0
    %718 = vmatpush1.bf16.msra.mxu0 %v693
    %719 = vmatprep.subr.bf16.mxu0 0
    %720 = vmatpush1.bf16.msra.mxu0 %v692
    %721 = vmatprep.subr.bf16.mxu0 0
    %722 = vmatpush1.bf16.msra.mxu0 %v691
    %723 = vmatprep.subr.bf16.mxu0 0
    %724 = vmatpush2.bf16.msra.mxu0 0
    %725 = vmatprep.subr.bf16.mxu0 0
    %726 = vmatpush2.bf16.msra.mxu0 0
    %727 = vmatprep.subr.bf16.mxu0 0
    %728 = vmatpush2.bf16.msra.mxu0 0
    %729 = vmatprep.subr.bf16.mxu0 0
    %730 = vmatpush2.bf16.msra.mxu0 0
    %731 = vmatprep.subr.bf16.mxu0 0
    %732 = vmatpush2.bf16.msra.mxu0 0
    %733 = vmatprep.subr.bf16.mxu0 0
    %734 = vmatpush2.bf16.msra.mxu0 0
    %735 = vmatprep.subr.bf16.mxu0 0
    %736 = vmatpush2.bf16.msra.mxu0 0
    %737 = vmatprep.subr.bf16.mxu0 0
    %738 = vmatpush2.bf16.msra.mxu0 0
    %739 = vmatprep.mubr.bf16.mxu0 0
    %740 = vmatmul.mubr.bf16.gmra.mxu0 %v642
    %v741 = vpop.f32.mrf.mxu0
    %v742 = vadd.f32 0.0, %v741
    %v743 = vpop.f32.mrf.mxu0
    %v744 = vpop.f32.mrf.mxu0
    %v745 = vadd.f32 0.0, %v744
    %v746 = vpop.f32.mrf.mxu0
    %747 = vdwg.mxu0
    %v748 = vpack.c.bf16 %v745, %v742
    %v749 = vld [vmem:[%s10] sm:$0x1]
    %v751 = vpack.i.b16 %v749, %v749
    %v753 = vlaneseq
    %v754 = vshrl.u32 %v753, 7
    %v755 = vsub.s32 0, %v754
    %v756 = vrot.slane %v751, %v755
    %v757 = vadd.bf16 %v748, %v756
    %v758 = vmax.bf16 %v757, 0
    %v759 = vmin.bf16 %v757, 0
    %v761 = vmul.bf16 %v759, 1069105081
    %v762 = vpow.bf16.pop %v761
    %v763 = vsub.bf16 %v762, 1065369472
    %v764 = vmul.bf16 %v763, 1071005654
    %v765 = vadd.bf16 %v758, %v764
    %v766 = vld [vmem:[#allocation13] sm:$0xf]
    %v767 = vld [vmem:[#allocation13 + $0x4] sm:$0xf]
    %v768 = vld [vmem:[#allocation13 + $0x8] sm:$0xf]
    %v769 = vld [vmem:[#allocation13 + $0xc] sm:$0xf]
    %v770 = vld [vmem:[#allocation13 + $0x10] sm:$0xf]
    %v771 = vld [vmem:[#allocation13 + $0x14] sm:$0xf]
    %v772 = vld [vmem:[#allocation13 + $0x18] sm:$0xf]
    %v773 = vld [vmem:[#allocation13 + $0x1c] sm:$0xf]
    %v774 = vld [vmem:[#allocation13 + $0x20] sm:$0xf]
    %v775 = vld [vmem:[#allocation13 + $0x24] sm:$0xf]
    %v776 = vld [vmem:[#allocation13 + $0x28] sm:$0xf]
    %v777 = vld [vmem:[#allocation13 + $0x2c] sm:$0xf]
    %v778 = vld [vmem:[#allocation13 + $0x30] sm:$0xf]
    %v779 = vld [vmem:[#allocation13 + $0x34] sm:$0xf]
    %v780 = vld [vmem:[#allocation13 + $0x38] sm:$0xf]
    %v781 = vld [vmem:[#allocation13 + $0x3c] sm:$0xf]
    %v782 = vld [vmem:[%s12] sm:$0x1]
    %v784 = vlaneseq
    %v785 = vshrl.u32 %v784, 7
    %v786 = vsub.s32 0, %v785
    %v787 = vrot.slane %v782, %v786
    %v805 = vunpack.c.l.b16 %v766
    %v806 = vunpack.c.l.b16 %v767
    %v807 = vunpack.c.l.b16 %v768
    %v808 = vunpack.c.l.b16 %v769
    %v809 = vunpack.c.l.b16 %v770
    %v810 = vunpack.c.l.b16 %v771
    %v811 = vunpack.c.l.b16 %v772
    %v812 = vunpack.c.l.b16 %v773
    %v813 = vunpack.c.l.b16 %v774
    %v814 = vunpack.c.l.b16 %v775
    %v815 = vunpack.c.l.b16 %v776
    %v816 = vunpack.c.l.b16 %v777
    %v817 = vunpack.c.l.b16 %v778
    %v818 = vunpack.c.l.b16 %v779
    %v819 = vunpack.c.l.b16 %v780
    %v820 = vunpack.c.l.b16 %v781
    %v821 = vpack.c.b16 %v806, %v805
    %v822 = vpack.c.b16 %v808, %v807
    %v823 = vpack.c.b16 %v810, %v809
    %v824 = vpack.c.b16 %v812, %v811
    %v825 = vpack.c.b16 %v814, %v813
    %v826 = vpack.c.b16 %v816, %v815
    %v827 = vpack.c.b16 %v818, %v817
    %v828 = vpack.c.b16 %v820, %v819
    %837 = vmatprep.subr.bf16.mxu0 0
    %838 = vmatpush1.bf16.msra.mxu0 %v828
    %839 = vmatprep.subr.bf16.mxu0 0
    %840 = vmatpush1.bf16.msra.mxu0 %v827
    %841 = vmatprep.subr.bf16.mxu0 0
    %842 = vmatpush1.bf16.msra.mxu0 %v826
    %843 = vmatprep.subr.bf16.mxu0 0
    %844 = vmatpush1.bf16.msra.mxu0 %v825
    %845 = vmatprep.subr.bf16.mxu0 0
    %846 = vmatpush1.bf16.msra.mxu0 %v824
    %847 = vmatprep.subr.bf16.mxu0 0
    %848 = vmatpush1.bf16.msra.mxu0 %v823
    %849 = vmatprep.subr.bf16.mxu0 0
    %850 = vmatpush1.bf16.msra.mxu0 %v822
    %851 = vmatprep.subr.bf16.mxu0 0
    %852 = vmatpush1.bf16.msra.mxu0 %v821
    %853 = vmatprep.subr.bf16.mxu0 0
    %854 = vmatpush2.bf16.msra.mxu0 0
    %855 = vmatprep.subr.bf16.mxu0 0
    %856 = vmatpush2.bf16.msra.mxu0 0
    %857 = vmatprep.subr.bf16.mxu0 0
    %858 = vmatpush2.bf16.msra.mxu0 0
    %859 = vmatprep.subr.bf16.mxu0 0
    %860 = vmatpush2.bf16.msra.mxu0 0
    %861 = vmatprep.subr.bf16.mxu0 0
    %862 = vmatpush2.bf16.msra.mxu0 0
    %863 = vmatprep.subr.bf16.mxu0 0
    %864 = vmatpush2.bf16.msra.mxu0 0
    %865 = vmatprep.subr.bf16.mxu0 0
    %866 = vmatpush2.bf16.msra.mxu0 0
    %867 = vmatprep.subr.bf16.mxu0 0
    %868 = vmatpush2.bf16.msra.mxu0 0
    %869 = vmatprep.mubr.bf16.mxu0 0
    %870 = vmatmul.mubr.bf16.gmra.mxu0 %v765
    %v871 = vpop.f32.mrf.mxu0
    %v872 = vadd.f32 %v787, %v871
    %v873 = vpop.f32.mrf.mxu0
    %v874 = vpop.f32.mrf.mxu0
    %v875 = vadd.f32 %v787, %v874
    %v876 = vpop.f32.mrf.mxu0
    %877 = vdwg.mxu0
    %878 = vst [vmem:[#allocation14] sm:$0xff] %v872
    %879 = vst [vmem:[#allocation14 + $0x8] sm:$0xff] %v875
    // Predicated region
    $region82: #{_forward_padded.1} parent=1 // pred_check
      _
    $region83: #{_forward_padded.1} parent=1 // pred_check_branch
      %881 = sbr.rel (0) target = $region85
    $region84: #{_forward_padded.1} parent=1 // pred_region
      %s883 = ssub.s32 256, 256
      %884 = vsyncadd [#allocation4], %s883
      %s885 = sshll.u32 [#allocation14], 4
      %s886 = int_to_ptr.vmem [resolvable:$true] %s885
      %891 = dma.vmem_to_hbm [thread:$0]  %s886, 256, %s13, [#allocation4], 128, 128, 8
    $region85: #{_forward_padded.1} parent=1 // pred_fallthru
      _
    // Predicated region
    $region86: #{_forward_padded.1} parent=1 // pred_check
      _
    $region87: #{_forward_padded.1} parent=1 // pred_check_branch
      %893 = sbr.rel (0) target = $region89
    $region88: #{_forward_padded.1} parent=1 // pred_region
      %894 = dma.done [#allocation4], 256
    $region89: #{_forward_padded.1} parent=1 // pred_fallthru
      _
    %895 = vsyncpa [#allocation3], 1
    %896 = vsyncpa [#allocation6], 1
    %897 = vsyncpa [#allocation9], 1
    %898 = vsyncpa [#allocation12], 1
    %899 = vsyncpa [#allocation4], 1

// kernel: _forward_padded.1
$region0: #{_forward_padded.1}
  #allocation0 [shape = 'u32[]', space=smem, size = 0x4, offset = 0x4, fixed_abs, tag = 'smem constant byte address 0x4 - core index']
  #allocation1 [shape = 'u32[144,128]{1,0:T(1,128)}', space=vmem, size = 0x12000, scoped, tag = 'internal scratch']
  %s0 = inlined_call_operand.hbm [shape: bf16[16,128], index: 0, kind: input, shape index: {}]
  %s1 = inlined_call_operand.hbm [shape: bf16[128,128], index: 1, kind: input, shape index: {}]
  %s2 = inlined_call_operand.vmem [shape: f32[1,128], index: 2, kind: input, shape index: {}]
  %s3 = inlined_call_operand.hbm [shape: bf16[128,128], index: 3, kind: input, shape index: {}]
  %s4 = inlined_call_operand.vmem [shape: f32[1,128], index: 4, kind: input, shape index: {}]
  %s5 = inlined_call_operand.hbm [shape: bf16[128,128], index: 5, kind: input, shape index: {}]
  %s6 = inlined_call_operand.vmem [shape: f32[1,128], index: 6, kind: input, shape index: {}]
  %s7 = inlined_call_operand.hbm [shape: bf16[128,128], index: 7, kind: input, shape index: {}]
  %s8 = inlined_call_operand.vmem [shape: f32[1,128], index: 8, kind: input, shape index: {}]
  %s9 = inlined_call_operand.hbm [shape: bf16[128,128], index: 9, kind: input, shape index: {}]
  %s10 = inlined_call_operand.vmem [shape: f32[1,128], index: 10, kind: input, shape index: {}]
  %s11 = inlined_call_operand.hbm [shape: bf16[128,128], index: 11, kind: input, shape index: {}]
  %s12 = inlined_call_operand.vmem [shape: f32[1,128], index: 12, kind: input, shape index: {}]
  %s13 = inlined_call_operand.hbm [shape: f32[16,128], index: 13, kind: output, shape index: {}]
  %s14 = sld [smem:[#allocation0]]
  $region90: #{_forward_padded.1} parent=0
    _
  %s16 = ssub.s32 1, %s14
  %s17 = scalar_select 0, %s16, %s14
  $region1: #{_forward_padded.1} parent=0
    #allocation2 [shape = 'u8[4096]{0}', space=vmem, size = 0x1000, scoped, tag = 'input window, operand 0, single buffered']
    #allocation3 [shape = 's32[1]{0}', space=sflag, size = 0x4, scoped, tag = 'scoped memory for _forward_padded.1']
    #allocation4 [shape = 's32[1]{0}', space=sflag, size = 0x4, scoped, tag = 'scoped memory for _forward_padded.1']
    #allocation5 [shape = 'u8[32768]{0}', space=vmem, size = 0x8000, scoped, tag = 'input window, operand 1, single buffered']
    #allocation6 [shape = 's32[1]{0}', space=sflag, size = 0x4, scoped, tag = 'scoped memory for _forward_padded.1']
    #allocation7 [shape = 'u8[32768]{0}', space=vmem, size = 0x8000, scoped, tag = 'input window, operand 3, single buffered']
    #allocation8 [shape = 'u8[32768]{0}', space=vmem, size = 0x8000, scoped, tag = 'input window, operand 5, single buffered']
    #allocation9 [shape = 's32[1]{0}', space=sflag, size = 0x4, scoped, tag = 'scoped memory for _forward_padded.1']
    #allocation10 [shape = 'u8[32768]{0}', space=vmem, size = 0x8000, scoped, tag = 'input window, operand 7, single buffered']
    #allocation11 [shape = 'u8[32768]{0}', space=vmem, size = 0x8000, scoped, tag = 'input window, operand 9, single buffered']
    #allocation12 [shape = 's32[1]{0}', space=sflag, size = 0x4, scoped, tag = 'scoped memory for _forward_padded.1']
    #allocation13 [shape = 'u8[32768]{0}', space=vmem, size = 0x8000, scoped, tag = 'input window, operand 11, single buffered']
    #allocation14 [shape = 'u8[8192]{0}', space=vmem, size = 0x2000, scoped, tag = 'output window, operand 0, single buffered']
    %18 = vsyncpa [#allocation3], 0
    %19 = vsyncpa [#allocation6], 0
    %20 = vsyncpa [#allocation9], 0
    %21 = vsyncpa [#allocation12], 0
    %22 = vsyncpa [#allocation4], 0
    // Predicated region
    $region2: #{_forward_padded.1} parent=1 // pred_check
      _
    $region3: #{_forward_padded.1} parent=1 // pred_check_branch
      %24 = sbr.rel (0) target = $region5
    $region4: #{_forward_padded.1} parent=1 // pred_region
      %s26 = ssub.s32 128, 128
      %27 = vsyncadd [#allocation3], %s26
      %s28 = sshll.u32 [#allocation2], 4
      %s29 = int_to_ptr.vmem [resolvable:$true] %s28
      %34 = dma.hbm_to_vmem [thread:$0]  %s0, 128, %s29, [#allocation3], 64, 64, 4
    $region5: #{_forward_padded.1} parent=1 // pred_fallthru
      _
    // Predicated region
    $region6: #{_forward_padded.1} parent=1 // pred_check
      _
    $region7: #{_forward_padded.1} parent=1 // pred_check_branch
      %36 = sbr.rel (0) target = $region9
    $region8: #{_forward_padded.1} parent=1 // pred_region
      %s38 = ssub.s32 1024, 1024
      %39 = vsyncadd [#allocation6], %s38
      %s40 = sshll.u32 [#allocation5], 4
      %s41 = int_to_ptr.vmem [resolvable:$true] %s40
      %46 = dma.hbm_to_vmem [thread:$0]  %s1, 1024, %s41, [#allocation6], 64, 64, 4
    $region9: #{_forward_padded.1} parent=1 // pred_fallthru
      _
    // Predicated region
    $region10: #{_forward_padded.1} parent=1 // pred_check
      _
    $region11: #{_forward_padded.1} parent=1 // pred_check_branch
      %48 = sbr.rel (0) target = $region13
    $region12: #{_forward_padded.1} parent=1 // pred_region
      _
    $region13: #{_forward_padded.1} parent=1 // pred_fallthru
      _
    // Predicated region
    $region14: #{_forward_padded.1} parent=1 // pred_check
      _
    $region15: #{_forward_padded.1} parent=1 // pred_check_branch
      %50 = sbr.rel (0) target = $region17
    $region16: #{_forward_padded.1} parent=1 // pred_region
      %s52 = ssub.s32 1024, 1024
      %53 = vsyncadd [#allocation6], %s52
      %s54 = sshll.u32 [#allocation7], 4
      %s55 = int_to_ptr.vmem [resolvable:$true] %s54
      %60 = dma.hbm_to_vmem [thread:$0]  %s3, 1024, %s55, [#allocation6], 64, 64, 4
    $region17: #{_forward_padded.1} parent=1 // pred_fallthru
      _
    // Predicated region
    $region18: #{_forward_padded.1} parent=1 // pred_check
      _
    $region19: #{_forward_padded.1} parent=1 // pred_check_branch
      %62 = sbr.rel (0) target = $region21
    $region20: #{_forward_padded.1} parent=1 // pred_region
      _
    $region21: #{_forward_padded.1} parent=1 // pred_fallthru
      _
    // Predicated region
    $region22: #{_forward_padded.1} parent=1 // pred_check
      _
    $region23: #{_forward_padded.1} parent=1 // pred_check_branch
      %64 = sbr.rel (0) target = $region25
    $region24: #{_forward_padded.1} parent=1 // pred_region
      %s66 = ssub.s32 1024, 1024
      %67 = vsyncadd [#allocation9], %s66
      %s68 = sshll.u32 [#allocation8], 4
      %s69 = int_to_ptr.vmem [resolvable:$true] %s68
      %74 = dma.hbm_to_vmem [thread:$0]  %s5, 1024, %s69, [#allocation9], 64, 64, 4
    $region25: #{_forward_padded.1} parent=1 // pred_fallthru
      _
    // Predicated region
    $region26: #{_forward_padded.1} parent=1 // pred_check
      _
    $region27: #{_forward_padded.1} parent=1 // pred_check_branch
      %76 = sbr.rel (0) target = $region29
    $region28: #{_forward_padded.1} parent=1 // pred_region
      _
    $region29: #{_forward_padded.1} parent=1 // pred_fallthru
      _
    // Predicated region
    $region30: #{_forward_padded.1} parent=1 // pred_check
      _
    $region31: #{_forward_padded.1} parent=1 // pred_check_branch
      %78 = sbr.rel (0) target = $region33
    $region32: #{_forward_padded.1} parent=1 // pred_region
      %s80 = ssub.s32 1024, 1024
      %81 = vsyncadd [#allocation9], %s80
      %s82 = sshll.u32 [#allocation10], 4
      %s83 = int_to_ptr.vmem [resolvable:$true] %s82
      %88 = dma.hbm_to_vmem [thread:$0]  %s7, 1024, %s83, [#allocation9], 64, 64, 4
    $region33: #{_forward_padded.1} parent=1 // pred_fallthru
      _
    // Predicated region
    $region34: #{_forward_padded.1} parent=1 // pred_check
      _
    $region35: #{_forward_padded.1} parent=1 // pred_check_branch
      %90 = sbr.rel (0) target = $region37
    $region36: #{_forward_padded.1} parent=1 // pred_region
      _
    $region37: #{_forward_padded.1} parent=1 // pred_fallthru
      _
    // Predicated region
    $region38: #{_forward_padded.1} parent=1 // pred_check
      _
    $region39: #{_forward_padded.1} parent=1 // pred_check_branch
      %92 = sbr.rel (0) target = $region41
    $region40: #{_forward_padded.1} parent=1 // pred_region
      %s94 = ssub.s32 1024, 1024
      %95 = vsyncadd [#allocation12], %s94
      %s96 = sshll.u32 [#allocation11], 4
      %s97 = int_to_ptr.vmem [resolvable:$true] %s96
      %102 = dma.hbm_to_vmem [thread:$0]  %s9, 1024, %s97, [#allocation12], 64, 64, 4
    $region41: #{_forward_padded.1} parent=1 // pred_fallthru
      _
    // Predicated region
    $region42: #{_forward_padded.1} parent=1 // pred_check
      _
    $region43: #{_forward_padded.1} parent=1 // pred_check_branch
      %104 = sbr.rel (0) target = $region45
    $region44: #{_forward_padded.1} parent=1 // pred_region
      _
    $region45: #{_forward_padded.1} parent=1 // pred_fallthru
      _
    // Predicated region
    $region46: #{_forward_padded.1} parent=1 // pred_check
      _
    $region47: #{_forward_padded.1} parent=1 // pred_check_branch
      %106 = sbr.rel (0) target = $region49
    $region48: #{_forward_padded.1} parent=1 // pred_region
      %s108 = ssub.s32 1024, 1024
      %109 = vsyncadd [#allocation12], %s108
      %s110 = sshll.u32 [#allocation13], 4
      %s111 = int_to_ptr.vmem [resolvable:$true] %s110
      %116 = dma.hbm_to_vmem [thread:$0]  %s11, 1024, %s111, [#allocation12], 64, 64, 4
    $region49: #{_forward_padded.1} parent=1 // pred_fallthru
      _
    // Predicated region
    $region50: #{_forward_padded.1} parent=1 // pred_check
      _
    $region51: #{_forward_padded.1} parent=1 // pred_check_branch
      %118 = sbr.rel (0) target = $region53
    $region52: #{_forward_padded.1} parent=1 // pred_region
      _
    $region53: #{_forward_padded.1} parent=1 // pred_fallthru
      _
    // Predicated region
    $region54: #{_forward_padded.1} parent=1 // pred_check
      _
    $region55: #{_forward_padded.1} parent=1 // pred_check_branch
      %120 = sbr.rel (0) target = $region57
    $region56: #{_forward_padded.1} parent=1 // pred_region
      %121 = dma.done [#allocation3], 128
    $region57: #{_forward_padded.1} parent=1 // pred_fallthru
      _
    // Predicated region
    $region58: #{_forward_padded.1} parent=1 // pred_check
      _
    $region59: #{_forward_padded.1} parent=1 // pred_check_branch
      %123 = sbr.rel (0) target = $region61
    $region60: #{_forward_padded.1} parent=1 // pred_region
      %124 = dma.done [#allocation6], 1024
    $region61: #{_forward_padded.1} parent=1 // pred_fallthru
      _
    // Predicated region
    $region62: #{_forward_padded.1} parent=1 // pred_check
      _
    $region63: #{_forward_padded.1} parent=1 // pred_check_branch
      %126 = sbr.rel (0) target = $region65
    $region64: #{_forward_padded.1} parent=1 // pred_region
      %127 = dma.done [#allocation6], 1024
    $region65: #{_forward_padded.1} parent=1 // pred_fallthru
      _
    // Predicated region
    $region66: #{_forward_padded.1} parent=1 // pred_check
      _
    $region67: #{_forward_padded.1} parent=1 // pred_check_branch
      %129 = sbr.rel (0) target = $region69
    $region68: #{_forward_padded.1} parent=1 // pred_region
      %130 = dma.done [#allocation9], 1024
    $region69: #{_forward_padded.1} parent=1 // pred_fallthru
      _
    // Predicated region
    $region70: #{_forward_padded.1} parent=1 // pred_check
      _
    $region71: #{_forward_padded.1} parent=1 // pred_check_branch
      %132 = sbr.rel (0) target = $region73
    $region72: #{_forward_padded.1} parent=1 // pred_region
      %133 = dma.done [#allocation9], 1024
    $region73: #{_forward_padded.1} parent=1 // pred_fallthru
      _
    // Predicated region
    $region74: #{_forward_padded.1} parent=1 // pred_check
      _
    $region75: #{_forward_padded.1} parent=1 // pred_check_branch
      %135 = sbr.rel (0) target = $region77
    $region76: #{_forward_padded.1} parent=1 // pred_region
      %136 = dma.done [#allocation12], 1024
    $region77: #{_forward_padded.1} parent=1 // pred_fallthru
      _
    // Predicated region
    $region78: #{_forward_padded.1} parent=1 // pred_check
      _
    $region79: #{_forward_padded.1} parent=1 // pred_check_branch
      %138 = sbr.rel (0) target = $region81
    $region80: #{_forward_padded.1} parent=1 // pred_region
      %139 = dma.done [#allocation12], 1024
    $region81: #{_forward_padded.1} parent=1 // pred_fallthru
      _
    %v141 = vld [vmem:[#allocation2] sm:$0xf]
    %v142 = vld [vmem:[#allocation2 + $0x4] sm:$0xf]
    %v143 = vld [vmem:[#allocation5] sm:$0xf]
    %v144 = vld [vmem:[#allocation5 + $0x4] sm:$0xf]
    %v145 = vld [vmem:[#allocation5 + $0x8] sm:$0xf]
    %v146 = vld [vmem:[#allocation5 + $0xc] sm:$0xf]
    %v147 = vld [vmem:[#allocation5 + $0x10] sm:$0xf]
    %v148 = vld [vmem:[#allocation5 + $0x14] sm:$0xf]
    %v149 = vld [vmem:[#allocation5 + $0x18] sm:$0xf]
    %v150 = vld [vmem:[#allocation5 + $0x1c] sm:$0xf]
    %v151 = vld [vmem:[#allocation5 + $0x20] sm:$0xf]
    %v152 = vld [vmem:[#allocation5 + $0x24] sm:$0xf]
    %v153 = vld [vmem:[#allocation5 + $0x28] sm:$0xf]
    %v154 = vld [vmem:[#allocation5 + $0x2c] sm:$0xf]
    %v155 = vld [vmem:[#allocation5 + $0x30] sm:$0xf]
    %v156 = vld [vmem:[#allocation5 + $0x34] sm:$0xf]
    %v157 = vld [vmem:[#allocation5 + $0x38] sm:$0xf]
    %v158 = vld [vmem:[#allocation5 + $0x3c] sm:$0xf]
    %v159 = vld [vmem:[%s2] sm:$0x1]
    %v161 = vlaneseq
    %v162 = vshrl.u32 %v161, 7
    %v163 = vsub.s32 0, %v162
    %v164 = vrot.slane %v159, %v163
    %v168 = vunpack.c.l.b16 %v141
    %v169 = vunpack.c.l.b16 %v142
    %v170 = vpack.c.b16 %v169, %v168
    %v188 = vunpack.c.l.b16 %v143
    %v189 = vunpack.c.l.b16 %v144
    %v190 = vunpack.c.l.b16 %v145
    %v191 = vunpack.c.l.b16 %v146
    %v192 = vunpack.c.l.b16 %v147
    %v193 = vunpack.c.l.b16 %v148
    %v194 = vunpack.c.l.b16 %v149
    %v195 = vunpack.c.l.b16 %v150
    %v196 = vunpack.c.l.b16 %v151
    %v197 = vunpack.c.l.b16 %v152
    %v198 = vunpack.c.l.b16 %v153
    %v199 = vunpack.c.l.b16 %v154
    %v200 = vunpack.c.l.b16 %v155
    %v201 = vunpack.c.l.b16 %v156
    %v202 = vunpack.c.l.b16 %v157
    %v203 = vunpack.c.l.b16 %v158
    %v204 = vpack.c.b16 %v189, %v188
    %v205 = vpack.c.b16 %v191, %v190
    %v206 = vpack.c.b16 %v193, %v192
    %v207 = vpack.c.b16 %v195, %v194
    %v208 = vpack.c.b16 %v197, %v196
    %v209 = vpack.c.b16 %v199, %v198
    %v210 = vpack.c.b16 %v201, %v200
    %v211 = vpack.c.b16 %v203, %v202
    %220 = vmatprep.subr.bf16.mxu0 0
    %221 = vmatpush1.bf16.msra.mxu0 %v211
    %222 = vmatprep.subr.bf16.mxu0 0
    %223 = vmatpush1.bf16.msra.mxu0 %v210
    %224 = vmatprep.subr.bf16.mxu0 0
    %225 = vmatpush1.bf16.msra.mxu0 %v209
    %226 = vmatprep.subr.bf16.mxu0 0
    %227 = vmatpush1.bf16.msra.mxu0 %v208
    %228 = vmatprep.subr.bf16.mxu0 0
    %229 = vmatpush1.bf16.msra.mxu0 %v207
    %230 = vmatprep.subr.bf16.mxu0 0
    %231 = vmatpush1.bf16.msra.mxu0 %v206
    %232 = vmatprep.subr.bf16.mxu0 0
    %233 = vmatpush1.bf16.msra.mxu0 %v205
    %234 = vmatprep.subr.bf16.mxu0 0
    %235 = vmatpush1.bf16.msra.mxu0 %v204
    %236 = vmatprep.subr.bf16.mxu0 0
    %237 = vmatpush2.bf16.msra.mxu0 0
    %238 = vmatprep.subr.bf16.mxu0 0
    %239 = vmatpush2.bf16.msra.mxu0 0
    %240 = vmatprep.subr.bf16.mxu0 0
    %241 = vmatpush2.bf16.msra.mxu0 0
    %242 = vmatprep.subr.bf16.mxu0 0
    %243 = vmatpush2.bf16.msra.mxu0 0
    %244 = vmatprep.subr.bf16.mxu0 0
    %245 = vmatpush2.bf16.msra.mxu0 0
    %246 = vmatprep.subr.bf16.mxu0 0
    %247 = vmatpush2.bf16.msra.mxu0 0
    %248 = vmatprep.subr.bf16.mxu0 0
    %249 = vmatpush2.bf16.msra.mxu0 0
    %250 = vmatprep.subr.bf16.mxu0 0
    %251 = vmatpush2.bf16.msra.mxu0 0
    %252 = vmatprep.mubr.bf16.mxu0 0
    %253 = vmatmul.mubr.bf16.gmra.mxu0 %v170
    %v254 = vpop.f32.mrf.mxu0
    %v255 = vadd.f32 %v164, %v254
    %v256 = vpop.f32.mrf.mxu0
    %v257 = vpop.f32.mrf.mxu0
    %v258 = vadd.f32 %v164, %v257
    %v259 = vpop.f32.mrf.mxu0
    %260 = vdwg.mxu0
    %v261 = vmax.f32 %v255, 0.0
    %v262 = vmax.f32 %v258, 0.0
    %v263 = vmin.f32 %v255, 0.0
    %v264 = vmin.f32 %v258, 0.0
    %v265 = vmul.f32 %v263, 1.442695
    %v266 = vpow.pop %v265
    %v267 = vmul.f32 %v264, 1.442695
    %v268 = vpow.pop %v267
    %v269 = vsub.f32 %v266, 1.0
    %v270 = vsub.f32 %v268, 1.0
    %v271 = vmul.f32 %v269, 1.6732632
    %v272 = vmul.f32 %v270, 1.6732632
    %v273 = vadd.f32 %v261, %v271
    %v274 = vadd.f32 %v262, %v272
    %v275 = vpack.c.bf16 %v274, %v273
    %v276 = vld [vmem:[#allocation7] sm:$0xf]
    %v277 = vld [vmem:[#allocation7 + $0x4] sm:$0xf]
    %v278 = vld [vmem:[#allocation7 + $0x8] sm:$0xf]
    %v279 = vld [vmem:[#allocation7 + $0xc] sm:$0xf]
    %v280 = vld [vmem:[#allocation7 + $0x10] sm:$0xf]
    %v281 = vld [vmem:[#allocation7 + $0x14] sm:$0xf]
    %v282 = vld [vmem:[#allocation7 + $0x18] sm:$0xf]
    %v283 = vld [vmem:[#allocation7 + $0x1c] sm:$0xf]
    %v284 = vld [vmem:[#allocation7 + $0x20] sm:$0xf]
    %v285 = vld [vmem:[#allocation7 + $0x24] sm:$0xf]
    %v286 = vld [vmem:[#allocation7 + $0x28] sm:$0xf]
    %v287 = vld [vmem:[#allocation7 + $0x2c] sm:$0xf]
    %v288 = vld [vmem:[#allocation7 + $0x30] sm:$0xf]
    %v289 = vld [vmem:[#allocation7 + $0x34] sm:$0xf]
    %v290 = vld [vmem:[#allocation7 + $0x38] sm:$0xf]
    %v291 = vld [vmem:[#allocation7 + $0x3c] sm:$0xf]
    %v292 = vld [vmem:[%s4] sm:$0x1]
    %v294 = vlaneseq
    %v295 = vshrl.u32 %v294, 7
    %v296 = vsub.s32 0, %v295
    %v297 = vrot.slane %v292, %v296
    %v315 = vunpack.c.l.b16 %v276
    %v316 = vunpack.c.l.b16 %v277
    %v317 = vunpack.c.l.b16 %v278
    %v318 = vunpack.c.l.b16 %v279
    %v319 = vunpack.c.l.b16 %v280
    %v320 = vunpack.c.l.b16 %v281
    %v321 = vunpack.c.l.b16 %v282
    %v322 = vunpack.c.l.b16 %v283
    %v323 = vunpack.c.l.b16 %v284
    %v324 = vunpack.c.l.b16 %v285
    %v325 = vunpack.c.l.b16 %v286
    %v326 = vunpack.c.l.b16 %v287
    %v327 = vunpack.c.l.b16 %v288
    %v328 = vunpack.c.l.b16 %v289
    %v329 = vunpack.c.l.b16 %v290
    %v330 = vunpack.c.l.b16 %v291
    %v331 = vpack.c.b16 %v316, %v315
    %v332 = vpack.c.b16 %v318, %v317
    %v333 = vpack.c.b16 %v320, %v319
    %v334 = vpack.c.b16 %v322, %v321
    %v335 = vpack.c.b16 %v324, %v323
    %v336 = vpack.c.b16 %v326, %v325
    %v337 = vpack.c.b16 %v328, %v327
    %v338 = vpack.c.b16 %v330, %v329
    %347 = vmatprep.subr.bf16.mxu0 0
    %348 = vmatpush1.bf16.msra.mxu0 %v338
    %349 = vmatprep.subr.bf16.mxu0 0
    %350 = vmatpush1.bf16.msra.mxu0 %v337
    %351 = vmatprep.subr.bf16.mxu0 0
    %352 = vmatpush1.bf16.msra.mxu0 %v336
    %353 = vmatprep.subr.bf16.mxu0 0
    %354 = vmatpush1.bf16.msra.mxu0 %v335
    %355 = vmatprep.subr.bf16.mxu0 0
    %356 = vmatpush1.bf16.msra.mxu0 %v334
    %357 = vmatprep.subr.bf16.mxu0 0
    %358 = vmatpush1.bf16.msra.mxu0 %v333
    %359 = vmatprep.subr.bf16.mxu0 0
    %360 = vmatpush1.bf16.msra.mxu0 %v332
    %361 = vmatprep.subr.bf16.mxu0 0
    %362 = vmatpush1.bf16.msra.mxu0 %v331
    %363 = vmatprep.subr.bf16.mxu0 0
    %364 = vmatpush2.bf16.msra.mxu0 0
    %365 = vmatprep.subr.bf16.mxu0 0
    %366 = vmatpush2.bf16.msra.mxu0 0
    %367 = vmatprep.subr.bf16.mxu0 0
    %368 = vmatpush2.bf16.msra.mxu0 0
    %369 = vmatprep.subr.bf16.mxu0 0
    %370 = vmatpush2.bf16.msra.mxu0 0
    %371 = vmatprep.subr.bf16.mxu0 0
    %372 = vmatpush2.bf16.msra.mxu0 0
    %373 = vmatprep.subr.bf16.mxu0 0
    %374 = vmatpush2.bf16.msra.mxu0 0
    %375 = vmatprep.subr.bf16.mxu0 0
    %376 = vmatpush2.bf16.msra.mxu0 0
    %377 = vmatprep.subr.bf16.mxu0 0
    %378 = vmatpush2.bf16.msra.mxu0 0
    %379 = vmatprep.mubr.bf16.mxu0 0
    %380 = vmatmul.mubr.bf16.gmra.mxu0 %v275
    %v381 = vpop.f32.mrf.mxu0
    %v382 = vadd.f32 %v297, %v381
    %v383 = vpop.f32.mrf.mxu0
    %v384 = vpop.f32.mrf.mxu0
    %v385 = vadd.f32 %v297, %v384
    %v386 = vpop.f32.mrf.mxu0
    %387 = vdwg.mxu0
    %v388 = vmax.f32 %v382, 0.0
    %v389 = vmax.f32 %v385, 0.0
    %v390 = vmin.f32 %v382, 0.0
    %v391 = vmin.f32 %v385, 0.0
    %v392 = vmul.f32 %v390, 1.442695
    %v393 = vpow.pop %v392
    %v394 = vmul.f32 %v391, 1.442695
    %v395 = vpow.pop %v394
    %v396 = vsub.f32 %v393, 1.0
    %v397 = vsub.f32 %v395, 1.0
    %v398 = vmul.f32 %v396, 1.6732632
    %v399 = vmul.f32 %v397, 1.6732632
    %v400 = vadd.f32 %v388, %v398
    %v401 = vadd.f32 %v389, %v399
    %v402 = vpack.c.bf16 %v401, %v400
    %v403 = vld [vmem:[#allocation8] sm:$0xf]
    %v404 = vld [vmem:[#allocation8 + $0x4] sm:$0xf]
    %v405 = vld [vmem:[#allocation8 + $0x8] sm:$0xf]
    %v406 = vld [vmem:[#allocation8 + $0xc] sm:$0xf]
    %v407 = vld [vmem:[#allocation8 + $0x10] sm:$0xf]
    %v408 = vld [vmem:[#allocation8 + $0x14] sm:$0xf]
    %v409 = vld [vmem:[#allocation8 + $0x18] sm:$0xf]
    %v410 = vld [vmem:[#allocation8 + $0x1c] sm:$0xf]
    %v411 = vld [vmem:[#allocation8 + $0x20] sm:$0xf]
    %v412 = vld [vmem:[#allocation8 + $0x24] sm:$0xf]
    %v413 = vld [vmem:[#allocation8 + $0x28] sm:$0xf]
    %v414 = vld [vmem:[#allocation8 + $0x2c] sm:$0xf]
    %v415 = vld [vmem:[#allocation8 + $0x30] sm:$0xf]
    %v416 = vld [vmem:[#allocation8 + $0x34] sm:$0xf]
    %v417 = vld [vmem:[#allocation8 + $0x38] sm:$0xf]
    %v418 = vld [vmem:[#allocation8 + $0x3c] sm:$0xf]
    %v419 = vld [vmem:[%s6] sm:$0x1]
    %v421 = vlaneseq
    %v422 = vshrl.u32 %v421, 7
    %v423 = vsub.s32 0, %v422
    %v424 = vrot.slane %v419, %v423
    %v442 = vunpack.c.l.b16 %v403
    %v443 = vunpack.c.l.b16 %v404
    %v444 = vunpack.c.l.b16 %v405
    %v445 = vunpack.c.l.b16 %v406
    %v446 = vunpack.c.l.b16 %v407
    %v447 = vunpack.c.l.b16 %v408
    %v448 = vunpack.c.l.b16 %v409
    %v449 = vunpack.c.l.b16 %v410
    %v450 = vunpack.c.l.b16 %v411
    %v451 = vunpack.c.l.b16 %v412
    %v452 = vunpack.c.l.b16 %v413
    %v453 = vunpack.c.l.b16 %v414
    %v454 = vunpack.c.l.b16 %v415
    %v455 = vunpack.c.l.b16 %v416
    %v456 = vunpack.c.l.b16 %v417
    %v457 = vunpack.c.l.b16 %v418
    %v458 = vpack.c.b16 %v443, %v442
    %v459 = vpack.c.b16 %v445, %v444
    %v460 = vpack.c.b16 %v447, %v446
    %v461 = vpack.c.b16 %v449, %v448
    %v462 = vpack.c.b16 %v451, %v450
    %v463 = vpack.c.b16 %v453, %v452
    %v464 = vpack.c.b16 %v455, %v454
    %v465 = vpack.c.b16 %v457, %v456
    %474 = vmatprep.subr.bf16.mxu0 0
    %475 = vmatpush1.bf16.msra.mxu0 %v465
    %476 = vmatprep.subr.bf16.mxu0 0
    %477 = vmatpush1.bf16.msra.mxu0 %v464
    %478 = vmatprep.subr.bf16.mxu0 0
    %479 = vmatpush1.bf16.msra.mxu0 %v463
    %480 = vmatprep.subr.bf16.mxu0 0
    %481 = vmatpush1.bf16.msra.mxu0 %v462
    %482 = vmatprep.subr.bf16.mxu0 0
    %483 = vmatpush1.bf16.msra.mxu0 %v461
    %484 = vmatprep.subr.bf16.mxu0 0
    %485 = vmatpush1.bf16.msra.mxu0 %v460
    %486 = vmatprep.subr.bf16.mxu0 0
    %487 = vmatpush1.bf16.msra.mxu0 %v459
    %488 = vmatprep.subr.bf16.mxu0 0
    %489 = vmatpush1.bf16.msra.mxu0 %v458
    %490 = vmatprep.subr.bf16.mxu0 0
    %491 = vmatpush2.bf16.msra.mxu0 0
    %492 = vmatprep.subr.bf16.mxu0 0
    %493 = vmatpush2.bf16.msra.mxu0 0
    %494 = vmatprep.subr.bf16.mxu0 0
    %495 = vmatpush2.bf16.msra.mxu0 0
    %496 = vmatprep.subr.bf16.mxu0 0
    %497 = vmatpush2.bf16.msra.mxu0 0
    %498 = vmatprep.subr.bf16.mxu0 0
    %499 = vmatpush2.bf16.msra.mxu0 0
    %500 = vmatprep.subr.bf16.mxu0 0
    %501 = vmatpush2.bf16.msra.mxu0 0
    %502 = vmatprep.subr.bf16.mxu0 0
    %503 = vmatpush2.bf16.msra.mxu0 0
    %504 = vmatprep.subr.bf16.mxu0 0
    %505 = vmatpush2.bf16.msra.mxu0 0
    %506 = vmatprep.mubr.bf16.mxu0 0
    %507 = vmatmul.mubr.bf16.gmra.mxu0 %v402
    %v508 = vpop.f32.mrf.mxu0
    %v509 = vadd.f32 %v424, %v508
    %v510 = vpop.f32.mrf.mxu0
    %v511 = vpop.f32.mrf.mxu0
    %v512 = vadd.f32 %v424, %v511
    %v513 = vpop.f32.mrf.mxu0
    %514 = vdwg.mxu0
    %v515 = vmax.f32 %v509, 0.0
    %v516 = vmax.f32 %v512, 0.0
    %v517 = vmin.f32 %v509, 0.0
    %v518 = vmin.f32 %v512, 0.0
    %v519 = vmul.f32 %v517, 1.442695
    %v520 = vpow.pop %v519
    %v521 = vmul.f32 %v518, 1.442695
    %v522 = vpow.pop %v521
    %v523 = vsub.f32 %v520, 1.0
    %v524 = vsub.f32 %v522, 1.0
    %v525 = vmul.f32 %v523, 1.6732632
    %v526 = vmul.f32 %v524, 1.6732632
    %v527 = vadd.f32 %v515, %v525
    %v528 = vadd.f32 %v516, %v526
    %v529 = vpack.c.bf16 %v528, %v527
    %v530 = vld [vmem:[#allocation10] sm:$0xf]
    %v531 = vld [vmem:[#allocation10 + $0x4] sm:$0xf]
    %v532 = vld [vmem:[#allocation10 + $0x8] sm:$0xf]
    %v533 = vld [vmem:[#allocation10 + $0xc] sm:$0xf]
    %v534 = vld [vmem:[#allocation10 + $0x10] sm:$0xf]
    %v535 = vld [vmem:[#allocation10 + $0x14] sm:$0xf]
    %v536 = vld [vmem:[#allocation10 + $0x18] sm:$0xf]
    %v537 = vld [vmem:[#allocation10 + $0x1c] sm:$0xf]
    %v538 = vld [vmem:[#allocation10 + $0x20] sm:$0xf]
    %v539 = vld [vmem:[#allocation10 + $0x24] sm:$0xf]
    %v540 = vld [vmem:[#allocation10 + $0x28] sm:$0xf]
    %v541 = vld [vmem:[#allocation10 + $0x2c] sm:$0xf]
    %v542 = vld [vmem:[#allocation10 + $0x30] sm:$0xf]
    %v543 = vld [vmem:[#allocation10 + $0x34] sm:$0xf]
    %v544 = vld [vmem:[#allocation10 + $0x38] sm:$0xf]
    %v545 = vld [vmem:[#allocation10 + $0x3c] sm:$0xf]
    %v546 = vld [vmem:[%s8] sm:$0x1]
    %v548 = vlaneseq
    %v549 = vshrl.u32 %v548, 7
    %v550 = vsub.s32 0, %v549
    %v551 = vrot.slane %v546, %v550
    %v569 = vunpack.c.l.b16 %v530
    %v570 = vunpack.c.l.b16 %v531
    %v571 = vunpack.c.l.b16 %v532
    %v572 = vunpack.c.l.b16 %v533
    %v573 = vunpack.c.l.b16 %v534
    %v574 = vunpack.c.l.b16 %v535
    %v575 = vunpack.c.l.b16 %v536
    %v576 = vunpack.c.l.b16 %v537
    %v577 = vunpack.c.l.b16 %v538
    %v578 = vunpack.c.l.b16 %v539
    %v579 = vunpack.c.l.b16 %v540
    %v580 = vunpack.c.l.b16 %v541
    %v581 = vunpack.c.l.b16 %v542
    %v582 = vunpack.c.l.b16 %v543
    %v583 = vunpack.c.l.b16 %v544
    %v584 = vunpack.c.l.b16 %v545
    %v585 = vpack.c.b16 %v570, %v569
    %v586 = vpack.c.b16 %v572, %v571
    %v587 = vpack.c.b16 %v574, %v573
    %v588 = vpack.c.b16 %v576, %v575
    %v589 = vpack.c.b16 %v578, %v577
    %v590 = vpack.c.b16 %v580, %v579
    %v591 = vpack.c.b16 %v582, %v581
    %v592 = vpack.c.b16 %v584, %v583
    %601 = vmatprep.subr.bf16.mxu0 0
    %602 = vmatpush1.bf16.msra.mxu0 %v592
    %603 = vmatprep.subr.bf16.mxu0 0
    %604 = vmatpush1.bf16.msra.mxu0 %v591
    %605 = vmatprep.subr.bf16.mxu0 0
    %606 = vmatpush1.bf16.msra.mxu0 %v590
    %607 = vmatprep.subr.bf16.mxu0 0
    %608 = vmatpush1.bf16.msra.mxu0 %v589
    %609 = vmatprep.subr.bf16.mxu0 0
    %610 = vmatpush1.bf16.msra.mxu0 %v588
    %611 = vmatprep.subr.bf16.mxu0 0
    %612 = vmatpush1.bf16.msra.mxu0 %v587
    %613 = vmatprep.subr.bf16.mxu0 0
    %614 = vmatpush1.bf16.msra.mxu0 %v586
    %615 = vmatprep.subr.bf16.mxu0 0
    %616 = vmatpush1.bf16.msra.mxu0 %v585
    %617 = vmatprep.subr.bf16.mxu0 0
    %618 = vmatpush2.bf16.msra.mxu0 0
    %619 = vmatprep.subr.bf16.mxu0 0
    %620 = vmatpush2.bf16.msra.mxu0 0
    %621 = vmatprep.subr.bf16.mxu0 0
    %622 = vmatpush2.bf16.msra.mxu0 0
    %623 = vmatprep.subr.bf16.mxu0 0
    %624 = vmatpush2.bf16.msra.mxu0 0
    %625 = vmatprep.subr.bf16.mxu0 0
    %626 = vmatpush2.bf16.msra.mxu0 0
    %627 = vmatprep.subr.bf16.mxu0 0
    %628 = vmatpush2.bf16.msra.mxu0 0
    %629 = vmatprep.subr.bf16.mxu0 0
    %630 = vmatpush2.bf16.msra.mxu0 0
    %631 = vmatprep.subr.bf16.mxu0 0
    %632 = vmatpush2.bf16.msra.mxu0 0
    %633 = vmatprep.mubr.bf16.mxu0 0
    %634 = vmatmul.mubr.bf16.gmra.mxu0 %v529
    %v635 = vpop.f32.mrf.mxu0
    %v636 = vadd.f32 %v551, %v635
    %v637 = vpop.f32.mrf.mxu0
    %v638 = vpop.f32.mrf.mxu0
    %v639 = vadd.f32 %v551, %v638
    %v640 = vpop.f32.mrf.mxu0
    %641 = vdwg.mxu0
    %v642 = vmax.f32 %v636, 0.0
    %v643 = vmax.f32 %v639, 0.0
    %v644 = vmin.f32 %v636, 0.0
    %v645 = vmin.f32 %v639, 0.0
    %v646 = vmul.f32 %v644, 1.442695
    %v647 = vpow.pop %v646
    %v648 = vmul.f32 %v645, 1.442695
    %v649 = vpow.pop %v648
    %v650 = vsub.f32 %v647, 1.0
    %v651 = vsub.f32 %v649, 1.0
    %v652 = vmul.f32 %v650, 1.6732632
    %v653 = vmul.f32 %v651, 1.6732632
    %v654 = vadd.f32 %v642, %v652
    %v655 = vadd.f32 %v643, %v653
    %v656 = vpack.c.bf16 %v655, %v654
    %v657 = vld [vmem:[#allocation11] sm:$0xf]
    %v658 = vld [vmem:[#allocation11 + $0x4] sm:$0xf]
    %v659 = vld [vmem:[#allocation11 + $0x8] sm:$0xf]
    %v660 = vld [vmem:[#allocation11 + $0xc] sm:$0xf]
    %v661 = vld [vmem:[#allocation11 + $0x10] sm:$0xf]
    %v662 = vld [vmem:[#allocation11 + $0x14] sm:$0xf]
    %v663 = vld [vmem:[#allocation11 + $0x18] sm:$0xf]
    %v664 = vld [vmem:[#allocation11 + $0x1c] sm:$0xf]
    %v665 = vld [vmem:[#allocation11 + $0x20] sm:$0xf]
    %v666 = vld [vmem:[#allocation11 + $0x24] sm:$0xf]
    %v667 = vld [vmem:[#allocation11 + $0x28] sm:$0xf]
    %v668 = vld [vmem:[#allocation11 + $0x2c] sm:$0xf]
    %v669 = vld [vmem:[#allocation11 + $0x30] sm:$0xf]
    %v670 = vld [vmem:[#allocation11 + $0x34] sm:$0xf]
    %v671 = vld [vmem:[#allocation11 + $0x38] sm:$0xf]
    %v672 = vld [vmem:[#allocation11 + $0x3c] sm:$0xf]
    %v673 = vld [vmem:[%s10] sm:$0x1]
    %v675 = vlaneseq
    %v676 = vshrl.u32 %v675, 7
    %v677 = vsub.s32 0, %v676
    %v678 = vrot.slane %v673, %v677
    %v696 = vunpack.c.l.b16 %v657
    %v697 = vunpack.c.l.b16 %v658
    %v698 = vunpack.c.l.b16 %v659
    %v699 = vunpack.c.l.b16 %v660
    %v700 = vunpack.c.l.b16 %v661
    %v701 = vunpack.c.l.b16 %v662
    %v702 = vunpack.c.l.b16 %v663
    %v703 = vunpack.c.l.b16 %v664
    %v704 = vunpack.c.l.b16 %v665
    %v705 = vunpack.c.l.b16 %v666
    %v706 = vunpack.c.l.b16 %v667
    %v707 = vunpack.c.l.b16 %v668
    %v708 = vunpack.c.l.b16 %v669
    %v709 = vunpack.c.l.b16 %v670
    %v710 = vunpack.c.l.b16 %v671
    %v711 = vunpack.c.l.b16 %v672
    %v712 = vpack.c.b16 %v697, %v696
    %v713 = vpack.c.b16 %v699, %v698
    %v714 = vpack.c.b16 %v701, %v700
    %v715 = vpack.c.b16 %v703, %v702
    %v716 = vpack.c.b16 %v705, %v704
    %v717 = vpack.c.b16 %v707, %v706
    %v718 = vpack.c.b16 %v709, %v708
    %v719 = vpack.c.b16 %v711, %v710
    %728 = vmatprep.subr.bf16.mxu0 0
    %729 = vmatpush1.bf16.msra.mxu0 %v719
    %730 = vmatprep.subr.bf16.mxu0 0
    %731 = vmatpush1.bf16.msra.mxu0 %v718
    %732 = vmatprep.subr.bf16.mxu0 0
    %733 = vmatpush1.bf16.msra.mxu0 %v717
    %734 = vmatprep.subr.bf16.mxu0 0
    %735 = vmatpush1.bf16.msra.mxu0 %v716
    %736 = vmatprep.subr.bf16.mxu0 0
    %737 = vmatpush1.bf16.msra.mxu0 %v715
    %738 = vmatprep.subr.bf16.mxu0 0
    %739 = vmatpush1.bf16.msra.mxu0 %v714
    %740 = vmatprep.subr.bf16.mxu0 0
    %741 = vmatpush1.bf16.msra.mxu0 %v713
    %742 = vmatprep.subr.bf16.mxu0 0
    %743 = vmatpush1.bf16.msra.mxu0 %v712
    %744 = vmatprep.subr.bf16.mxu0 0
    %745 = vmatpush2.bf16.msra.mxu0 0
    %746 = vmatprep.subr.bf16.mxu0 0
    %747 = vmatpush2.bf16.msra.mxu0 0
    %748 = vmatprep.subr.bf16.mxu0 0
    %749 = vmatpush2.bf16.msra.mxu0 0
    %750 = vmatprep.subr.bf16.mxu0 0
    %751 = vmatpush2.bf16.msra.mxu0 0
    %752 = vmatprep.subr.bf16.mxu0 0
    %753 = vmatpush2.bf16.msra.mxu0 0
    %754 = vmatprep.subr.bf16.mxu0 0
    %755 = vmatpush2.bf16.msra.mxu0 0
    %756 = vmatprep.subr.bf16.mxu0 0
    %757 = vmatpush2.bf16.msra.mxu0 0
    %758 = vmatprep.subr.bf16.mxu0 0
    %759 = vmatpush2.bf16.msra.mxu0 0
    %760 = vmatprep.mubr.bf16.mxu0 0
    %761 = vmatmul.mubr.bf16.gmra.mxu0 %v656
    %v762 = vpop.f32.mrf.mxu0
    %v763 = vadd.f32 %v678, %v762
    %v764 = vpop.f32.mrf.mxu0
    %v765 = vpop.f32.mrf.mxu0
    %v766 = vadd.f32 %v678, %v765
    %v767 = vpop.f32.mrf.mxu0
    %768 = vdwg.mxu0
    %v769 = vmax.f32 %v763, 0.0
    %v770 = vmax.f32 %v766, 0.0
    %v771 = vmin.f32 %v763, 0.0
    %v772 = vmin.f32 %v766, 0.0
    %v773 = vmul.f32 %v771, 1.442695
    %v774 = vpow.pop %v773
    %v775 = vmul.f32 %v772, 1.442695
    %v776 = vpow.pop %v775
    %v777 = vsub.f32 %v774, 1.0
    %v778 = vsub.f32 %v776, 1.0
    %v779 = vmul.f32 %v777, 1.6732632
    %v780 = vmul.f32 %v778, 1.6732632
    %v781 = vadd.f32 %v769, %v779
    %v782 = vadd.f32 %v770, %v780
    %v783 = vpack.c.bf16 %v782, %v781
    %v784 = vld [vmem:[#allocation13] sm:$0xf]
    %v785 = vld [vmem:[#allocation13 + $0x4] sm:$0xf]
    %v786 = vld [vmem:[#allocation13 + $0x8] sm:$0xf]
    %v787 = vld [vmem:[#allocation13 + $0xc] sm:$0xf]
    %v788 = vld [vmem:[#allocation13 + $0x10] sm:$0xf]
    %v789 = vld [vmem:[#allocation13 + $0x14] sm:$0xf]
    %v790 = vld [vmem:[#allocation13 + $0x18] sm:$0xf]
    %v791 = vld [vmem:[#allocation13 + $0x1c] sm:$0xf]
    %v792 = vld [vmem:[#allocation13 + $0x20] sm:$0xf]
    %v793 = vld [vmem:[#allocation13 + $0x24] sm:$0xf]
    %v794 = vld [vmem:[#allocation13 + $0x28] sm:$0xf]
    %v795 = vld [vmem:[#allocation13 + $0x2c] sm:$0xf]
    %v796 = vld [vmem:[#allocation13 + $0x30] sm:$0xf]
    %v797 = vld [vmem:[#allocation13 + $0x34] sm:$0xf]
    %v798 = vld [vmem:[#allocation13 + $0x38] sm:$0xf]
    %v799 = vld [vmem:[#allocation13 + $0x3c] sm:$0xf]
    %v800 = vld [vmem:[%s12] sm:$0x1]
    %v802 = vlaneseq
    %v803 = vshrl.u32 %v802, 7
    %v804 = vsub.s32 0, %v803
    %v805 = vrot.slane %v800, %v804
    %v823 = vunpack.c.l.b16 %v784
    %v824 = vunpack.c.l.b16 %v785
    %v825 = vunpack.c.l.b16 %v786
    %v826 = vunpack.c.l.b16 %v787
    %v827 = vunpack.c.l.b16 %v788
    %v828 = vunpack.c.l.b16 %v789
    %v829 = vunpack.c.l.b16 %v790
    %v830 = vunpack.c.l.b16 %v791
    %v831 = vunpack.c.l.b16 %v792
    %v832 = vunpack.c.l.b16 %v793
    %v833 = vunpack.c.l.b16 %v794
    %v834 = vunpack.c.l.b16 %v795
    %v835 = vunpack.c.l.b16 %v796
    %v836 = vunpack.c.l.b16 %v797
    %v837 = vunpack.c.l.b16 %v798
    %v838 = vunpack.c.l.b16 %v799
    %v839 = vpack.c.b16 %v824, %v823
    %v840 = vpack.c.b16 %v826, %v825
    %v841 = vpack.c.b16 %v828, %v827
    %v842 = vpack.c.b16 %v830, %v829
    %v843 = vpack.c.b16 %v832, %v831
    %v844 = vpack.c.b16 %v834, %v833
    %v845 = vpack.c.b16 %v836, %v835
    %v846 = vpack.c.b16 %v838, %v837
    %855 = vmatprep.subr.bf16.mxu0 0
    %856 = vmatpush1.bf16.msra.mxu0 %v846
    %857 = vmatprep.subr.bf16.mxu0 0
    %858 = vmatpush1.bf16.msra.mxu0 %v845
    %859 = vmatprep.subr.bf16.mxu0 0
    %860 = vmatpush1.bf16.msra.mxu0 %v844
    %861 = vmatprep.subr.bf16.mxu0 0
    %862 = vmatpush1.bf16.msra.mxu0 %v843
    %863 = vmatprep.subr.bf16.mxu0 0
    %864 = vmatpush1.bf16.msra.mxu0 %v842
    %865 = vmatprep.subr.bf16.mxu0 0
    %866 = vmatpush1.bf16.msra.mxu0 %v841
    %867 = vmatprep.subr.bf16.mxu0 0
    %868 = vmatpush1.bf16.msra.mxu0 %v840
    %869 = vmatprep.subr.bf16.mxu0 0
    %870 = vmatpush1.bf16.msra.mxu0 %v839
    %871 = vmatprep.subr.bf16.mxu0 0
    %872 = vmatpush2.bf16.msra.mxu0 0
    %873 = vmatprep.subr.bf16.mxu0 0
    %874 = vmatpush2.bf16.msra.mxu0 0
    %875 = vmatprep.subr.bf16.mxu0 0
    %876 = vmatpush2.bf16.msra.mxu0 0
    %877 = vmatprep.subr.bf16.mxu0 0
    %878 = vmatpush2.bf16.msra.mxu0 0
    %879 = vmatprep.subr.bf16.mxu0 0
    %880 = vmatpush2.bf16.msra.mxu0 0
    %881 = vmatprep.subr.bf16.mxu0 0
    %882 = vmatpush2.bf16.msra.mxu0 0
    %883 = vmatprep.subr.bf16.mxu0 0
    %884 = vmatpush2.bf16.msra.mxu0 0
    %885 = vmatprep.subr.bf16.mxu0 0
    %886 = vmatpush2.bf16.msra.mxu0 0
    %887 = vmatprep.mubr.bf16.mxu0 0
    %888 = vmatmul.mubr.bf16.gmra.mxu0 %v783
    %v889 = vpop.f32.mrf.mxu0
    %v890 = vadd.f32 %v805, %v889
    %v891 = vpop.f32.mrf.mxu0
    %v892 = vpop.f32.mrf.mxu0
    %v893 = vadd.f32 %v805, %v892
    %v894 = vpop.f32.mrf.mxu0
    %895 = vdwg.mxu0
    %896 = vst [vmem:[#allocation14] sm:$0xff] %v890
    %897 = vst [vmem:[#allocation14 + $0x8] sm:$0xff] %v893
    // Predicated region
    $region82: #{_forward_padded.1} parent=1 // pred_check
      _
    $region83: #{_forward_padded.1} parent=1 // pred_check_branch
      %899 = sbr.rel (0) target = $region85
    $region84: #{_forward_padded.1} parent=1 // pred_region
      %s901 = ssub.s32 256, 256
      %902 = vsyncadd [#allocation4], %s901
      %s903 = sshll.u32 [#allocation14], 4
      %s904 = int_to_ptr.vmem [resolvable:$true] %s903
      %909 = dma.vmem_to_hbm [thread:$0]  %s904, 256, %s13, [#allocation4], 128, 128, 8
    $region85: #{_forward_padded.1} parent=1 // pred_fallthru
      _
    // Predicated region
    $region86: #{_forward_padded.1} parent=1 // pred_check
      _
    $region87: #{_forward_padded.1} parent=1 // pred_check_branch
      %911 = sbr.rel (0) target = $region89
    $region88: #{_forward_padded.1} parent=1 // pred_region
      %912 = dma.done [#allocation4], 256
    $region89: #{_forward_padded.1} parent=1 // pred_fallthru
      _
    %913 = vsyncpa [#allocation3], 1
    %914 = vsyncpa [#allocation6], 1
    %915 = vsyncpa [#allocation9], 1
    %916 = vsyncpa [#allocation12], 1
    %917 = vsyncpa [#allocation4], 1

</llo_original>
